<compile_context>
chip_gen: v6e
topology: v6e:2x2x1
jax: 0.10.0
libtpu: 0.0.40
codegen_flags: <defaults>
</compile_context>

<pallas_src>
import functools

import jax
import jax.numpy as jnp
from jax.experimental import pallas as pl
from jax.experimental.pallas import tpu as pltpu

_BN_EPS = 1e-5


# ---------------------------------------------------------------------------
# Fused GNN kernel: all message-passing iterations + final 1x1 conv.
# ---------------------------------------------------------------------------
def gnn_fused_kernel(x0_ref, src_row_ref, dst_row_ref, src_col_ref, dst_col_ref,
                     dinv_p_ref, dinv_c_ref,
                     wd_ref, ws_ref, b1_ref,
                     w2p_ref, b2p_ref, w2c_ref, b2c_ref,
                     wfa_ref, wfb_ref, wfc_ref, bf_ref, wf2_ref, bf2_ref,
                     wc_ref, bc_ref,
                     out_ref, *, num_iterations):
    N, D = x0_ref.shape
    E = src_row_ref.shape[1]
    f32, bf16 = jnp.float32, jnp.bfloat16

    def dot(a, b):
        # bf16 MXU operands, f32 accumulation.
        return jnp.dot(a.astype(bf16), b.astype(bf16), preferred_element_type=f32)

    # ---- one-hot gather / scatter matrices, built once (hoisted out of the loop) ----
    # Fused gather one-hot [E, 2N]: lanes :N pick x[dst]-side rows, lanes N: pick
    # x[src]-side rows of the sublane-stacked projections.  g @ [a; b] == a[dst] + b[src].
    lane2 = jax.lax.broadcasted_iota(jnp.int32, (E, 2 * N), 1)
    tgt = jnp.where(lane2 < N, dst_col_ref[...], src_col_ref[...] + N)
    g = (lane2 == tgt).astype(bf16)
    # Scatter one-hots [N, E] (node on sublane, edge on lane): pure 0/1 -> exact in bf16;
    # degree normalisation is applied after the matmul.
    node_sub = jax.lax.broadcasted_iota(jnp.int32, (N, E), 0)
    s_dst = (node_sub == dst_row_ref[...]).astype(bf16)
    s_src = (node_sub == src_row_ref[...]).astype(bf16)

    dinv_p = dinv_p_ref[...]                                   # [N, 1] f32
    dinv_c = dinv_c_ref[...]                                   # [N, 1] f32

    x = x0_ref[...]                                            # [N, D] f32
    # num_iterations is small and static -> fully unrolled at trace time.
    for _ in range(num_iterations):
        # First edge-MLP layer, fused over (parent | child) lane halves:
        # project x once, stack on sublanes, gather with ONE K=2N matmul.
        ab = jnp.concatenate([dot(x, wd_ref[...]),             # dst-side halves
                              dot(x, ws_ref[...])], axis=0)    # src-side halves -> [2N, 2D]
        z1 = dot(g, ab) + b1_ref[...]                          # [E, 2D] = [z1_parent | z1_child]
        h = jnp.maximum(z1, 0.0)                               # BN folded into weights
        # Second edge-MLP layer: separate parent / child messages ([E, D] each).
        m_p = jnp.maximum(dot(h, w2p_ref[...]) + b2p_ref[...], 0.0)
        m_c = jnp.maximum(dot(h, w2c_ref[...]) + b2c_ref[...], 0.0)
        # Scatter-sum on the MXU, then degree normalisation (post-matmul, [N, D] work).
        fi = dot(s_dst, m_p) * dinv_p                          # parent aggregation
        fo = dot(s_src, m_c) * dinv_c                          # child aggregation
        # Final_Agg_induct on cat([x, fi, fo]) + residual; fc pre-split -> no concat.
        hh = jnp.maximum(dot(x, wfa_ref[...]) + dot(fi, wfb_ref[...])
                         + dot(fo, wfc_ref[...]) + bf_ref[...], 0.0)   # [N, 2D]
        x = x + dot(hh, wf2_ref[...]) + bf2_ref[...]

    # conv1: Conv1d(D, 2D, kernel=1) on x.unsqueeze(-1) == Linear(D -> 2D)
    out_ref[...] = dot(x, wc_ref[...]) + bc_ref[...]


def gnn_forward(node_ids, edges, emb, fused, num_iterations):
    N = node_ids.shape[0]
    D = emb.shape[1]
    x0 = emb[node_ids].astype(jnp.float32)                    # initial_encoder (once)
    src = edges[0].astype(jnp.int32)
    dst = edges[1].astype(jnp.int32)

    # degree() and 1/deg with inf -> 0 (tiny, computed once in the wrapper)
    deg_p = jnp.zeros((N,), jnp.float32).at[dst].add(1.0)      # degree(edge_index[1])
    deg_c = jnp.zeros((N,), jnp.float32).at[src].add(1.0)      # degree(edge_index[0])
    dinv_p = jnp.where(deg_p > 0, 1.0 / deg_p, 0.0)[:, None]
    dinv_c = jnp.where(deg_c > 0, 1.0 / deg_c, 0.0)[:, None]

    args = (x0,
            src[None, :], dst[None, :],                        # [1, E] rows  (scatter one-hot)
            src[:, None], dst[:, None],                        # [E, 1] cols  (gather one-hot)
            dinv_p, dinv_c,
            fused["wd"], fused["ws"], fused["b1"],
            fused["w2p"], fused["b2p"], fused["w2c"], fused["b2c"],
            fused["wfa"], fused["wfb"], fused["wfc"], fused["bf"],
            fused["wf2"], fused["bf2"],
            fused["wc"], fused["bc"])

    kernel = functools.partial(gnn_fused_kernel, num_iterations=num_iterations)
    return pl.pallas_call(
        kernel,
        out_shape=jax.ShapeDtypeStruct((N, 2 * D), jnp.float32),
        in_specs=[pl.BlockSpec(memory_space=pltpu.MemorySpace.VMEM)] * len(args),
        out_specs=pl.BlockSpec(memory_space=pltpu.MemorySpace.VMEM),
    )(*args)


# ---------------------------------------------------------------------------
# Parameter construction (torch-default init shapes) with BN folded in.
# ---------------------------------------------------------------------------
def _fold_bn(w_t, b, gamma, beta, mean, var):
    """Fold eval-mode BatchNorm1d into the preceding Linear (w_t is [in, out])."""
    scale = gamma / jnp.sqrt(var + _BN_EPS)
    return w_t * scale[None, :], b * scale + (beta - mean * scale)


def make_msg_mlp_params(key, D):
    """Parent/Child aggregation MLP: Linear(2D->D)+BN+ReLU+Linear(D->D)+BN+ReLU."""
    k = jax.random.split(key, 4)
    lim1 = 1.0 / jnp.sqrt(2.0 * D)
    W1 = jax.random.uniform(k[0], (D, 2 * D), jnp.float32, -lim1, lim1)   # torch [out, in]
    b1 = jax.random.uniform(k[1], (D,), jnp.float32, -lim1, lim1)
    lim2 = 1.0 / jnp.sqrt(1.0 * D)
    W2 = jax.random.uniform(k[2], (D, D), jnp.float32, -lim2, lim2)
    b2 = jax.random.uniform(k[3], (D,), jnp.float32, -lim2, lim2)
    # BatchNorm1d at PyTorch init, eval mode: gamma=1, beta=0, mean=0, var=1
    ones, zeros = jnp.ones((D,)), jnp.zeros((D,))
    w1, b1 = _fold_bn(W1.T, b1, ones, zeros, zeros, ones)                 # [2D, D]
    w2, b2 = _fold_bn(W2.T, b2, ones, zeros, zeros, ones)                 # [D, D]
    return dict(w1a=w1[:D], w1b=w1[D:], b1=b1, w2=w2, b2=b2)


def make_final_agg_params(key, D):
    k = jax.random.split(key, 4)
    lim1 = 1.0 / jnp.sqrt(3.0 * D)
    Wf = jax.random.uniform(k[0], (2 * D, 3 * D), jnp.float32, -lim1, lim1)
    bf = jax.random.uniform(k[1], (2 * D,), jnp.float32, -lim1, lim1)
    lim2 = 1.0 / jnp.sqrt(2.0 * D)
    W2 = jax.random.uniform(k[2], (D, 2 * D), jnp.float32, -lim2, lim2)
    b2 = jax.random.uniform(k[3], (D,), jnp.float32, -lim2, lim2)
    wf = Wf.T                                                             # [3D, 2D]
    return dict(wfa=wf[:D], wfb=wf[D:2 * D], wfc=wf[2 * D:], bf=bf, w2=W2.T, b2=b2)


def make_conv_params(key, D):
    k = jax.random.split(key, 2)
    lim = 1.0 / jnp.sqrt(1.0 * D)
    W = jax.random.uniform(k[0], (2 * D, D, 1), jnp.float32, -lim, lim)   # Conv1d weight
    b = jax.random.uniform(k[1], (2 * D,), jnp.float32, -lim, lim)
    return W[:, :, 0].T, b                                                # [D, 2D], [2D]


def fuse_params(parent, child, final, conv_w, conv_b, D):
    """Pack per-module params into the fused, kernel-ready layouts (weights in bf16)."""
    bf16 = jnp.bfloat16
    zD = jnp.zeros((D, D), jnp.float32)
    return dict(
        # first edge-MLP layer, grouped by which endpoint gets gathered:
        #   parent: x_i = x[dst] -> w1a_p ; x_j = x[src] -> w1b_p
        #   child : x_i = x[src] -> w1a_c ; x_j = x[dst] -> w1b_c
        wd=jnp.concatenate([parent["w1a"], child["w1b"]], axis=1).astype(bf16),   # [D, 2D]
        ws=jnp.concatenate([parent["w1b"], child["w1a"]], axis=1).astype(bf16),   # [D, 2D]
        b1=jnp.concatenate([parent["b1"], child["b1"]])[None, :],                 # [1, 2D] f32
        # second edge-MLP layer: column blocks of the block-diagonal weight so the
        # parent / child messages come out as separate [E, D] tensors.
        w2p=jnp.concatenate([parent["w2"], zD], axis=0).astype(bf16),             # [2D, D]
        b2p=parent["b2"][None, :],
        w2c=jnp.concatenate([zD, child["w2"]], axis=0).astype(bf16),              # [2D, D]
        b2c=child["b2"][None, :],
        # Final_Agg_induct: fc pre-split for x, fi, fo
        wfa=final["wfa"].astype(bf16), wfb=final["wfb"].astype(bf16),
        wfc=final["wfc"].astype(bf16), bf=final["bf"][None, :],
        wf2=final["w2"].astype(bf16), bf2=final["b2"][None, :],
        # conv1 (1x1) == Linear(D -> 2D)
        wc=conv_w.astype(bf16), bc=conv_b[None, :],
    )


# ---------------------------------------------------------------------------
# Pure-JAX reference (gather + scatter-add) using the same BN-folded params.
# ---------------------------------------------------------------------------
def reference_forward(node_ids, edges, emb, parent, child, final, conv_w, conv_b,
                      num_iterations):
    x = emb[node_ids].astype(jnp.float32)
    src, dst = edges[0], edges[1]
    N, D = x.shape
    deg_p = jnp.zeros((N,), jnp.float32).at[dst].add(1.0)
    deg_c = jnp.zeros((N,), jnp.float32).at[src].add(1.0)
    dinv_p = jnp.where(deg_p > 0, 1.0 / deg_p, 0.0)[:, None]
    dinv_c = jnp.where(deg_c > 0, 1.0 / deg_c, 0.0)[:, None]

    def edge_mlp(p, xi, xj):
        h = jnp.maximum(xi @ p["w1a"] + xj @ p["w1b"] + p["b1"], 0.0)
        return jnp.maximum(h @ p["w2"] + p["b2"], 0.0)

    for _ in range(num_iterations):
        m_p = edge_mlp(parent, x[dst], x[src])
        fi = dinv_p * jnp.zeros((N, D), jnp.float32).at[dst].add(m_p)
        m_c = edge_mlp(child, x[src], x[dst])
        fo = dinv_c * jnp.zeros((N, D), jnp.float32).at[src].add(m_c)
        h = jnp.maximum(x @ final["wfa"] + fi @ final["wfb"] + fo @ final["wfc"]
                        + final["bf"], 0.0)
        x = x + h @ final["w2"] + final["b2"]
    return x @ conv_w + conv_b


if __name__ == "__main__":
    key = jax.random.PRNGKey(0)
    vocab = 50          # input_shape
    D = 32              # embedding_dim
    N = 16              # number of graph nodes
    E = 24              # number of edges
    num_iterations = 2

    kk = jax.random.split(key, 8)
    node_ids = jax.random.randint(kk[0], (N,), 0, vocab)
    src = jax.random.randint(kk[1], (E,), 0, N)
    dst = jax.random.randint(kk[2], (E,), 0, N)
    edges = jnp.stack([src, dst]).astype(jnp.int32)            # edge_index [2, E]

    emb = jax.random.normal(kk[3], (vocab, D), jnp.float32) * 0.1
    parent_p = make_msg_mlp_params(kk[4], D)
    child_p = make_msg_mlp_params(kk[5], D)
    final_p = make_final_agg_params(kk[6], D)
    conv_w, conv_b = make_conv_params(kk[7], D)
    fused = fuse_params(parent_p, child_p, final_p, conv_w, conv_b, D)

    fwd = jax.jit(functools.partial(gnn_forward, num_iterations=num_iterations))
    out = fwd(node_ids, edges, emb, fused)
    jax.block_until_ready(out)
    assert out.shape == (N, 2 * D) and out.dtype == jnp.float32

    with jax.default_matmul_precision("highest"):
        ref = reference_forward(node_ids, edges, emb, parent_p, child_p, final_p,
                                conv_w, conv_b, num_iterations)
    err = float(jnp.max(jnp.abs(out - ref)))
    # bf16 MXU operands (f32 accumulation) vs an f32 'highest'-precision reference.
    assert err < 2e-2, f"max abs error vs reference: {err}"
    print("KERNEL_OK")
</pallas_src>

<mosaic_0001>
module attributes {stable_mosaic.version = 11 : i64} {
  func.func private @main(%arg0: i32) attributes {dimension_semantics = [#tpu.dimension_semantics<core_parallel>], iteration_bounds = array<i64: 2>, tpu.core_type = #tpu.core_type<sc_scalar_subcore>, window_params = []} {
    return
  }
}

module attributes {stable_mosaic.version = 11 : i64} {
  func.func private @main(%arg0: i32) attributes {dimension_semantics = [#tpu.dimension_semantics<core_parallel>], iteration_bounds = array<i64: 2>, tpu.core_type = #tpu.core_type<sc_scalar_subcore>, window_params = []} {
    return
  }
}

module attributes {stable_mosaic.version = 11 : i64} {
  func.func @gnn_fused_kernel(%arg0: memref<16x32xf32, #tpu.memory_space<vmem>>, %arg1: memref<1x24xi32, #tpu.memory_space<vmem>>, %arg2: memref<1x24xi32, #tpu.memory_space<vmem>>, %arg3: memref<24x1xi32, #tpu.memory_space<vmem>>, %arg4: memref<24x1xi32, #tpu.memory_space<vmem>>, %arg5: memref<16x1xf32, #tpu.memory_space<vmem>>, %arg6: memref<16x1xf32, #tpu.memory_space<vmem>>, %arg7: memref<32x64xbf16, #tpu.memory_space<vmem>>, %arg8: memref<32x64xbf16, #tpu.memory_space<vmem>>, %arg9: memref<1x64xf32, #tpu.memory_space<vmem>>, %arg10: memref<64x32xbf16, #tpu.memory_space<vmem>>, %arg11: memref<1x32xf32, #tpu.memory_space<vmem>>, %arg12: memref<64x32xbf16, #tpu.memory_space<vmem>>, %arg13: memref<1x32xf32, #tpu.memory_space<vmem>>, %arg14: memref<32x64xbf16, #tpu.memory_space<vmem>>, %arg15: memref<32x64xbf16, #tpu.memory_space<vmem>>, %arg16: memref<32x64xbf16, #tpu.memory_space<vmem>>, %arg17: memref<1x64xf32, #tpu.memory_space<vmem>>, %arg18: memref<64x32xbf16, #tpu.memory_space<vmem>>, %arg19: memref<1x32xf32, #tpu.memory_space<vmem>>, %arg20: memref<32x64xbf16, #tpu.memory_space<vmem>>, %arg21: memref<1x64xf32, #tpu.memory_space<vmem>>, %arg22: memref<16x64xf32, #tpu.memory_space<vmem>>) attributes {dimension_semantics = [], scalar_prefetch = 0 : i64, scratch_operands = 0 : i64, tpu.core_type = #tpu.core_type<tc>} {
    %0 = tpu.iota {dimensions = array<i32: 1>} : vector<24x32xi32>
    %c16_i32 = arith.constant 16 : i32
    %1 = vector.broadcast %c16_i32 : i32 to vector<24x32xi32>
    %2 = arith.cmpi slt, %0, %1 : vector<24x32xi32>
    %c0 = arith.constant 0 : index
    %c0_0 = arith.constant 0 : index
    %3 = vector.load %arg4[%c0, %c0_0] : memref<24x1xi32, #tpu.memory_space<vmem>>, vector<24x1xi32>
    %c0_1 = arith.constant 0 : index
    %c0_2 = arith.constant 0 : index
    %4 = vector.load %arg3[%c0_1, %c0_2] : memref<24x1xi32, #tpu.memory_space<vmem>>, vector<24x1xi32>
    %c16_i32_3 = arith.constant 16 : i32
    %5 = vector.broadcast %c16_i32_3 : i32 to vector<24x1xi32>
    %6 = arith.addi %4, %5 : vector<24x1xi32>
    %7 = vector.shape_cast %3 : vector<24x1xi32> to vector<24x1xi32>
    %8 = vector.broadcast %7 : vector<24x1xi32> to vector<24x32xi32>
    %9 = vector.shape_cast %6 : vector<24x1xi32> to vector<24x1xi32>
    %10 = vector.broadcast %9 : vector<24x1xi32> to vector<24x32xi32>
    %11 = arith.select %2, %8, %10 : vector<24x32xi1>, vector<24x32xi32>
    %12 = arith.cmpi eq, %0, %11 : vector<24x32xi32>
    %13 = arith.extui %12 : vector<24x32xi1> to vector<24x32xi32>
    %14 = arith.sitofp %13 : vector<24x32xi32> to vector<24x32xf32>
    %15 = arith.truncf %14 : vector<24x32xf32> to vector<24x32xbf16>
    %16 = tpu.iota {dimensions = array<i32: 0>} : vector<16x24xi32>
    %c0_4 = arith.constant 0 : index
    %c0_5 = arith.constant 0 : index
    %17 = vector.load %arg2[%c0_4, %c0_5] : memref<1x24xi32, #tpu.memory_space<vmem>>, vector<1x24xi32>
    %18 = vector.broadcast %17 : vector<1x24xi32> to vector<16x24xi32>
    %19 = arith.cmpi eq, %16, %18 : vector<16x24xi32>
    %20 = arith.extui %19 : vector<16x24xi1> to vector<16x24xi32>
    %21 = arith.sitofp %20 : vector<16x24xi32> to vector<16x24xf32>
    %22 = arith.truncf %21 : vector<16x24xf32> to vector<16x24xbf16>
    %c0_6 = arith.constant 0 : index
    %c0_7 = arith.constant 0 : index
    %23 = vector.load %arg1[%c0_6, %c0_7] : memref<1x24xi32, #tpu.memory_space<vmem>>, vector<1x24xi32>
    %24 = vector.broadcast %23 : vector<1x24xi32> to vector<16x24xi32>
    %25 = arith.cmpi eq, %16, %24 : vector<16x24xi32>
    %26 = arith.extui %25 : vector<16x24xi1> to vector<16x24xi32>
    %27 = arith.sitofp %26 : vector<16x24xi32> to vector<16x24xf32>
    %28 = arith.truncf %27 : vector<16x24xf32> to vector<16x24xbf16>
    %c0_8 = arith.constant 0 : index
    %c0_9 = arith.constant 0 : index
    %29 = vector.load %arg5[%c0_8, %c0_9] : memref<16x1xf32, #tpu.memory_space<vmem>>, vector<16x1xf32>
    %c0_10 = arith.constant 0 : index
    %c0_11 = arith.constant 0 : index
    %30 = vector.load %arg6[%c0_10, %c0_11] : memref<16x1xf32, #tpu.memory_space<vmem>>, vector<16x1xf32>
    %c0_12 = arith.constant 0 : index
    %c0_13 = arith.constant 0 : index
    %31 = vector.load %arg0[%c0_12, %c0_13] : memref<16x32xf32, #tpu.memory_space<vmem>>, vector<16x32xf32>
    %c0_14 = arith.constant 0 : index
    %c0_15 = arith.constant 0 : index
    %32 = vector.load %arg7[%c0_14, %c0_15] : memref<32x64xbf16, #tpu.memory_space<vmem>>, vector<32x64xbf16>
    %33 = arith.truncf %31 : vector<16x32xf32> to vector<16x32xbf16>
    %cst = arith.constant dense<0.000000e+00> : vector<16x64xf32>
    %34 = tpu.matmul %33, %32, %cst {dimension_numbers = #tpu.dot_dimension_numbers<[1], [0], [0], [1], [0, 0, 1, 1], [], []>} : vector<16x32xbf16>, vector<32x64xbf16>, vector<16x64xf32> -> vector<16x64xf32>
    %c0_16 = arith.constant 0 : index
    %c0_17 = arith.constant 0 : index
    %35 = vector.load %arg8[%c0_16, %c0_17] : memref<32x64xbf16, #tpu.memory_space<vmem>>, vector<32x64xbf16>
    %36 = arith.truncf %31 : vector<16x32xf32> to vector<16x32xbf16>
    %cst_18 = arith.constant dense<0.000000e+00> : vector<16x64xf32>
    %37 = tpu.matmul %36, %35, %cst_18 {dimension_numbers = #tpu.dot_dimension_numbers<[1], [0], [0], [1], [0, 0, 1, 1], [], []>} : vector<16x32xbf16>, vector<32x64xbf16>, vector<16x64xf32> -> vector<16x64xf32>
    %38 = tpu.concatenate %34, %37 in 0 : vector<16x64xf32>, vector<16x64xf32> -> vector<32x64xf32>
    %39 = arith.truncf %38 : vector<32x64xf32> to vector<32x64xbf16>
    %cst_19 = arith.constant dense<0.000000e+00> : vector<24x64xf32>
    %40 = tpu.matmul %15, %39, %cst_19 {dimension_numbers = #tpu.dot_dimension_numbers<[1], [0], [0], [1], [0, 0, 1, 1], [], []>} : vector<24x32xbf16>, vector<32x64xbf16>, vector<24x64xf32> -> vector<24x64xf32>
    %c0_20 = arith.constant 0 : index
    %c0_21 = arith.constant 0 : index
    %41 = vector.load %arg9[%c0_20, %c0_21] : memref<1x64xf32, #tpu.memory_space<vmem>>, vector<1x64xf32>
    %42 = vector.broadcast %41 : vector<1x64xf32> to vector<24x64xf32>
    %43 = arith.addf %40, %42 : vector<24x64xf32>
    %cst_22 = arith.constant 0.000000e+00 : f32
    %44 = vector.broadcast %cst_22 : f32 to vector<24x64xf32>
    %45 = arith.maximumf %43, %44 : vector<24x64xf32>
    %c0_23 = arith.constant 0 : index
    %c0_24 = arith.constant 0 : index
    %46 = vector.load %arg10[%c0_23, %c0_24] : memref<64x32xbf16, #tpu.memory_space<vmem>>, vector<64x32xbf16>
    %47 = arith.truncf %45 : vector<24x64xf32> to vector<24x64xbf16>
    %cst_25 = arith.constant dense<0.000000e+00> : vector<24x32xf32>
    %48 = tpu.matmul %47, %46, %cst_25 {dimension_numbers = #tpu.dot_dimension_numbers<[1], [0], [0], [1], [0, 0, 1, 1], [], []>} : vector<24x64xbf16>, vector<64x32xbf16>, vector<24x32xf32> -> vector<24x32xf32>
    %c0_26 = arith.constant 0 : index
    %c0_27 = arith.constant 0 : index
    %49 = vector.load %arg11[%c0_26, %c0_27] : memref<1x32xf32, #tpu.memory_space<vmem>>, vector<1x32xf32>
    %50 = vector.broadcast %49 : vector<1x32xf32> to vector<24x32xf32>
    %51 = arith.addf %48, %50 : vector<24x32xf32>
    %cst_28 = arith.constant 0.000000e+00 : f32
    %52 = vector.broadcast %cst_28 : f32 to vector<24x32xf32>
    %53 = arith.maximumf %51, %52 : vector<24x32xf32>
    %c0_29 = arith.constant 0 : index
    %c0_30 = arith.constant 0 : index
    %54 = vector.load %arg12[%c0_29, %c0_30] : memref<64x32xbf16, #tpu.memory_space<vmem>>, vector<64x32xbf16>
    %55 = arith.truncf %45 : vector<24x64xf32> to vector<24x64xbf16>
    %cst_31 = arith.constant dense<0.000000e+00> : vector<24x32xf32>
    %56 = tpu.matmul %55, %54, %cst_31 {dimension_numbers = #tpu.dot_dimension_numbers<[1], [0], [0], [1], [0, 0, 1, 1], [], []>} : vector<24x64xbf16>, vector<64x32xbf16>, vector<24x32xf32> -> vector<24x32xf32>
    %c0_32 = arith.constant 0 : index
    %c0_33 = arith.constant 0 : index
    %57 = vector.load %arg13[%c0_32, %c0_33] : memref<1x32xf32, #tpu.memory_space<vmem>>, vector<1x32xf32>
    %58 = vector.broadcast %57 : vector<1x32xf32> to vector<24x32xf32>
    %59 = arith.addf %56, %58 : vector<24x32xf32>
    %cst_34 = arith.constant 0.000000e+00 : f32
    %60 = vector.broadcast %cst_34 : f32 to vector<24x32xf32>
    %61 = arith.maximumf %59, %60 : vector<24x32xf32>
    %62 = arith.truncf %53 : vector<24x32xf32> to vector<24x32xbf16>
    %cst_35 = arith.constant dense<0.000000e+00> : vector<16x32xf32>
    %63 = tpu.matmul %22, %62, %cst_35 {dimension_numbers = #tpu.dot_dimension_numbers<[1], [0], [0], [1], [0, 0, 1, 1], [], []>} : vector<16x24xbf16>, vector<24x32xbf16>, vector<16x32xf32> -> vector<16x32xf32>
    %64 = vector.broadcast %29 : vector<16x1xf32> to vector<16x32xf32>
    %65 = arith.mulf %63, %64 : vector<16x32xf32>
    %66 = arith.truncf %61 : vector<24x32xf32> to vector<24x32xbf16>
    %cst_36 = arith.constant dense<0.000000e+00> : vector<16x32xf32>
    %67 = tpu.matmul %28, %66, %cst_36 {dimension_numbers = #tpu.dot_dimension_numbers<[1], [0], [0], [1], [0, 0, 1, 1], [], []>} : vector<16x24xbf16>, vector<24x32xbf16>, vector<16x32xf32> -> vector<16x32xf32>
    %68 = vector.broadcast %30 : vector<16x1xf32> to vector<16x32xf32>
    %69 = arith.mulf %67, %68 : vector<16x32xf32>
    %c0_37 = arith.constant 0 : index
    %c0_38 = arith.constant 0 : index
    %70 = vector.load %arg14[%c0_37, %c0_38] : memref<32x64xbf16, #tpu.memory_space<vmem>>, vector<32x64xbf16>
    %71 = arith.truncf %31 : vector<16x32xf32> to vector<16x32xbf16>
    %cst_39 = arith.constant dense<0.000000e+00> : vector<16x64xf32>
    %72 = tpu.matmul %71, %70, %cst_39 {dimension_numbers = #tpu.dot_dimension_numbers<[1], [0], [0], [1], [0, 0, 1, 1], [], []>} : vector<16x32xbf16>, vector<32x64xbf16>, vector<16x64xf32> -> vector<16x64xf32>
    %c0_40 = arith.constant 0 : index
    %c0_41 = arith.constant 0 : index
    %73 = vector.load %arg15[%c0_40, %c0_41] : memref<32x64xbf16, #tpu.memory_space<vmem>>, vector<32x64xbf16>
    %74 = arith.truncf %65 : vector<16x32xf32> to vector<16x32xbf16>
    %cst_42 = arith.constant dense<0.000000e+00> : vector<16x64xf32>
    %75 = tpu.matmul %74, %73, %cst_42 {dimension_numbers = #tpu.dot_dimension_numbers<[1], [0], [0], [1], [0, 0, 1, 1], [], []>} : vector<16x32xbf16>, vector<32x64xbf16>, vector<16x64xf32> -> vector<16x64xf32>
    %76 = arith.addf %72, %75 : vector<16x64xf32>
    %c0_43 = arith.constant 0 : index
    %c0_44 = arith.constant 0 : index
    %77 = vector.load %arg16[%c0_43, %c0_44] : memref<32x64xbf16, #tpu.memory_space<vmem>>, vector<32x64xbf16>
    %78 = arith.truncf %69 : vector<16x32xf32> to vector<16x32xbf16>
    %cst_45 = arith.constant dense<0.000000e+00> : vector<16x64xf32>
    %79 = tpu.matmul %78, %77, %cst_45 {dimension_numbers = #tpu.dot_dimension_numbers<[1], [0], [0], [1], [0, 0, 1, 1], [], []>} : vector<16x32xbf16>, vector<32x64xbf16>, vector<16x64xf32> -> vector<16x64xf32>
    %80 = arith.addf %76, %79 : vector<16x64xf32>
    %c0_46 = arith.constant 0 : index
    %c0_47 = arith.constant 0 : index
    %81 = vector.load %arg17[%c0_46, %c0_47] : memref<1x64xf32, #tpu.memory_space<vmem>>, vector<1x64xf32>
    %82 = vector.broadcast %81 : vector<1x64xf32> to vector<16x64xf32>
    %83 = arith.addf %80, %82 : vector<16x64xf32>
    %cst_48 = arith.constant 0.000000e+00 : f32
    %84 = vector.broadcast %cst_48 : f32 to vector<16x64xf32>
    %85 = arith.maximumf %83, %84 : vector<16x64xf32>
    %c0_49 = arith.constant 0 : index
    %c0_50 = arith.constant 0 : index
    %86 = vector.load %arg18[%c0_49, %c0_50] : memref<64x32xbf16, #tpu.memory_space<vmem>>, vector<64x32xbf16>
    %87 = arith.truncf %85 : vector<16x64xf32> to vector<16x64xbf16>
    %cst_51 = arith.constant dense<0.000000e+00> : vector<16x32xf32>
    %88 = tpu.matmul %87, %86, %cst_51 {dimension_numbers = #tpu.dot_dimension_numbers<[1], [0], [0], [1], [0, 0, 1, 1], [], []>} : vector<16x64xbf16>, vector<64x32xbf16>, vector<16x32xf32> -> vector<16x32xf32>
    %89 = arith.addf %31, %88 : vector<16x32xf32>
    %c0_52 = arith.constant 0 : index
    %c0_53 = arith.constant 0 : index
    %90 = vector.load %arg19[%c0_52, %c0_53] : memref<1x32xf32, #tpu.memory_space<vmem>>, vector<1x32xf32>
    %91 = vector.broadcast %90 : vector<1x32xf32> to vector<16x32xf32>
    %92 = arith.addf %89, %91 : vector<16x32xf32>
    %c0_54 = arith.constant 0 : index
    %c0_55 = arith.constant 0 : index
    %93 = vector.load %arg7[%c0_54, %c0_55] : memref<32x64xbf16, #tpu.memory_space<vmem>>, vector<32x64xbf16>
    %94 = arith.truncf %92 : vector<16x32xf32> to vector<16x32xbf16>
    %cst_56 = arith.constant dense<0.000000e+00> : vector<16x64xf32>
    %95 = tpu.matmul %94, %93, %cst_56 {dimension_numbers = #tpu.dot_dimension_numbers<[1], [0], [0], [1], [0, 0, 1, 1], [], []>} : vector<16x32xbf16>, vector<32x64xbf16>, vector<16x64xf32> -> vector<16x64xf32>
    %c0_57 = arith.constant 0 : index
    %c0_58 = arith.constant 0 : index
    %96 = vector.load %arg8[%c0_57, %c0_58] : memref<32x64xbf16, #tpu.memory_space<vmem>>, vector<32x64xbf16>
    %97 = arith.truncf %92 : vector<16x32xf32> to vector<16x32xbf16>
    %cst_59 = arith.constant dense<0.000000e+00> : vector<16x64xf32>
    %98 = tpu.matmul %97, %96, %cst_59 {dimension_numbers = #tpu.dot_dimension_numbers<[1], [0], [0], [1], [0, 0, 1, 1], [], []>} : vector<16x32xbf16>, vector<32x64xbf16>, vector<16x64xf32> -> vector<16x64xf32>
    %99 = tpu.concatenate %95, %98 in 0 : vector<16x64xf32>, vector<16x64xf32> -> vector<32x64xf32>
    %100 = arith.truncf %99 : vector<32x64xf32> to vector<32x64xbf16>
    %cst_60 = arith.constant dense<0.000000e+00> : vector<24x64xf32>
    %101 = tpu.matmul %15, %100, %cst_60 {dimension_numbers = #tpu.dot_dimension_numbers<[1], [0], [0], [1], [0, 0, 1, 1], [], []>} : vector<24x32xbf16>, vector<32x64xbf16>, vector<24x64xf32> -> vector<24x64xf32>
    %c0_61 = arith.constant 0 : index
    %c0_62 = arith.constant 0 : index
    %102 = vector.load %arg9[%c0_61, %c0_62] : memref<1x64xf32, #tpu.memory_space<vmem>>, vector<1x64xf32>
    %103 = vector.broadcast %102 : vector<1x64xf32> to vector<24x64xf32>
    %104 = arith.addf %101, %103 : vector<24x64xf32>
    %cst_63 = arith.constant 0.000000e+00 : f32
    %105 = vector.broadcast %cst_63 : f32 to vector<24x64xf32>
    %106 = arith.maximumf %104, %105 : vector<24x64xf32>
    %c0_64 = arith.constant 0 : index
    %c0_65 = arith.constant 0 : index
    %107 = vector.load %arg10[%c0_64, %c0_65] : memref<64x32xbf16, #tpu.memory_space<vmem>>, vector<64x32xbf16>
    %108 = arith.truncf %106 : vector<24x64xf32> to vector<24x64xbf16>
    %cst_66 = arith.constant dense<0.000000e+00> : vector<24x32xf32>
    %109 = tpu.matmul %108, %107, %cst_66 {dimension_numbers = #tpu.dot_dimension_numbers<[1], [0], [0], [1], [0, 0, 1, 1], [], []>} : vector<24x64xbf16>, vector<64x32xbf16>, vector<24x32xf32> -> vector<24x32xf32>
    %c0_67 = arith.constant 0 : index
    %c0_68 = arith.constant 0 : index
    %110 = vector.load %arg11[%c0_67, %c0_68] : memref<1x32xf32, #tpu.memory_space<vmem>>, vector<1x32xf32>
    %111 = vector.broadcast %110 : vector<1x32xf32> to vector<24x32xf32>
    %112 = arith.addf %109, %111 : vector<24x32xf32>
    %cst_69 = arith.constant 0.000000e+00 : f32
    %113 = vector.broadcast %cst_69 : f32 to vector<24x32xf32>
    %114 = arith.maximumf %112, %113 : vector<24x32xf32>
    %c0_70 = arith.constant 0 : index
    %c0_71 = arith.constant 0 : index
    %115 = vector.load %arg12[%c0_70, %c0_71] : memref<64x32xbf16, #tpu.memory_space<vmem>>, vector<64x32xbf16>
    %116 = arith.truncf %106 : vector<24x64xf32> to vector<24x64xbf16>
    %cst_72 = arith.constant dense<0.000000e+00> : vector<24x32xf32>
    %117 = tpu.matmul %116, %115, %cst_72 {dimension_numbers = #tpu.dot_dimension_numbers<[1], [0], [0], [1], [0, 0, 1, 1], [], []>} : vector<24x64xbf16>, vector<64x32xbf16>, vector<24x32xf32> -> vector<24x32xf32>
    %c0_73 = arith.constant 0 : index
    %c0_74 = arith.constant 0 : index
    %118 = vector.load %arg13[%c0_73, %c0_74] : memref<1x32xf32, #tpu.memory_space<vmem>>, vector<1x32xf32>
    %119 = vector.broadcast %118 : vector<1x32xf32> to vector<24x32xf32>
    %120 = arith.addf %117, %119 : vector<24x32xf32>
    %cst_75 = arith.constant 0.000000e+00 : f32
    %121 = vector.broadcast %cst_75 : f32 to vector<24x32xf32>
    %122 = arith.maximumf %120, %121 : vector<24x32xf32>
    %123 = arith.truncf %114 : vector<24x32xf32> to vector<24x32xbf16>
    %cst_76 = arith.constant dense<0.000000e+00> : vector<16x32xf32>
    %124 = tpu.matmul %22, %123, %cst_76 {dimension_numbers = #tpu.dot_dimension_numbers<[1], [0], [0], [1], [0, 0, 1, 1], [], []>} : vector<16x24xbf16>, vector<24x32xbf16>, vector<16x32xf32> -> vector<16x32xf32>
    %125 = vector.broadcast %29 : vector<16x1xf32> to vector<16x32xf32>
    %126 = arith.mulf %124, %125 : vector<16x32xf32>
    %127 = arith.truncf %122 : vector<24x32xf32> to vector<24x32xbf16>
    %cst_77 = arith.constant dense<0.000000e+00> : vector<16x32xf32>
    %128 = tpu.matmul %28, %127, %cst_77 {dimension_numbers = #tpu.dot_dimension_numbers<[1], [0], [0], [1], [0, 0, 1, 1], [], []>} : vector<16x24xbf16>, vector<24x32xbf16>, vector<16x32xf32> -> vector<16x32xf32>
    %129 = vector.broadcast %30 : vector<16x1xf32> to vector<16x32xf32>
    %130 = arith.mulf %128, %129 : vector<16x32xf32>
    %c0_78 = arith.constant 0 : index
    %c0_79 = arith.constant 0 : index
    %131 = vector.load %arg14[%c0_78, %c0_79] : memref<32x64xbf16, #tpu.memory_space<vmem>>, vector<32x64xbf16>
    %132 = arith.truncf %92 : vector<16x32xf32> to vector<16x32xbf16>
    %cst_80 = arith.constant dense<0.000000e+00> : vector<16x64xf32>
    %133 = tpu.matmul %132, %131, %cst_80 {dimension_numbers = #tpu.dot_dimension_numbers<[1], [0], [0], [1], [0, 0, 1, 1], [], []>} : vector<16x32xbf16>, vector<32x64xbf16>, vector<16x64xf32> -> vector<16x64xf32>
    %c0_81 = arith.constant 0 : index
    %c0_82 = arith.constant 0 : index
    %134 = vector.load %arg15[%c0_81, %c0_82] : memref<32x64xbf16, #tpu.memory_space<vmem>>, vector<32x64xbf16>
    %135 = arith.truncf %126 : vector<16x32xf32> to vector<16x32xbf16>
    %cst_83 = arith.constant dense<0.000000e+00> : vector<16x64xf32>
    %136 = tpu.matmul %135, %134, %cst_83 {dimension_numbers = #tpu.dot_dimension_numbers<[1], [0], [0], [1], [0, 0, 1, 1], [], []>} : vector<16x32xbf16>, vector<32x64xbf16>, vector<16x64xf32> -> vector<16x64xf32>
    %137 = arith.addf %133, %136 : vector<16x64xf32>
    %c0_84 = arith.constant 0 : index
    %c0_85 = arith.constant 0 : index
    %138 = vector.load %arg16[%c0_84, %c0_85] : memref<32x64xbf16, #tpu.memory_space<vmem>>, vector<32x64xbf16>
    %139 = arith.truncf %130 : vector<16x32xf32> to vector<16x32xbf16>
    %cst_86 = arith.constant dense<0.000000e+00> : vector<16x64xf32>
    %140 = tpu.matmul %139, %138, %cst_86 {dimension_numbers = #tpu.dot_dimension_numbers<[1], [0], [0], [1], [0, 0, 1, 1], [], []>} : vector<16x32xbf16>, vector<32x64xbf16>, vector<16x64xf32> -> vector<16x64xf32>
    %141 = arith.addf %137, %140 : vector<16x64xf32>
    %c0_87 = arith.constant 0 : index
    %c0_88 = arith.constant 0 : index
    %142 = vector.load %arg17[%c0_87, %c0_88] : memref<1x64xf32, #tpu.memory_space<vmem>>, vector<1x64xf32>
    %143 = vector.broadcast %142 : vector<1x64xf32> to vector<16x64xf32>
    %144 = arith.addf %141, %143 : vector<16x64xf32>
    %cst_89 = arith.constant 0.000000e+00 : f32
    %145 = vector.broadcast %cst_89 : f32 to vector<16x64xf32>
    %146 = arith.maximumf %144, %145 : vector<16x64xf32>
    %c0_90 = arith.constant 0 : index
    %c0_91 = arith.constant 0 : index
    %147 = vector.load %arg18[%c0_90, %c0_91] : memref<64x32xbf16, #tpu.memory_space<vmem>>, vector<64x32xbf16>
    %148 = arith.truncf %146 : vector<16x64xf32> to vector<16x64xbf16>
    %cst_92 = arith.constant dense<0.000000e+00> : vector<16x32xf32>
    %149 = tpu.matmul %148, %147, %cst_92 {dimension_numbers = #tpu.dot_dimension_numbers<[1], [0], [0], [1], [0, 0, 1, 1], [], []>} : vector<16x64xbf16>, vector<64x32xbf16>, vector<16x32xf32> -> vector<16x32xf32>
    %150 = arith.addf %92, %149 : vector<16x32xf32>
    %c0_93 = arith.constant 0 : index
    %c0_94 = arith.constant 0 : index
    %151 = vector.load %arg19[%c0_93, %c0_94] : memref<1x32xf32, #tpu.memory_space<vmem>>, vector<1x32xf32>
    %152 = vector.broadcast %151 : vector<1x32xf32> to vector<16x32xf32>
    %153 = arith.addf %150, %152 : vector<16x32xf32>
    %c0_95 = arith.constant 0 : index
    %c0_96 = arith.constant 0 : index
    %154 = vector.load %arg20[%c0_95, %c0_96] : memref<32x64xbf16, #tpu.memory_space<vmem>>, vector<32x64xbf16>
    %155 = arith.truncf %153 : vector<16x32xf32> to vector<16x32xbf16>
    %cst_97 = arith.constant dense<0.000000e+00> : vector<16x64xf32>
    %156 = tpu.matmul %155, %154, %cst_97 {dimension_numbers = #tpu.dot_dimension_numbers<[1], [0], [0], [1], [0, 0, 1, 1], [], []>} : vector<16x32xbf16>, vector<32x64xbf16>, vector<16x64xf32> -> vector<16x64xf32>
    %c0_98 = arith.constant 0 : index
    %c0_99 = arith.constant 0 : index
    %157 = vector.load %arg21[%c0_98, %c0_99] : memref<1x64xf32, #tpu.memory_space<vmem>>, vector<1x64xf32>
    %158 = vector.broadcast %157 : vector<1x64xf32> to vector<16x64xf32>
    %159 = arith.addf %156, %158 : vector<16x64xf32>
    %c0_100 = arith.constant 0 : index
    %c0_101 = arith.constant 0 : index
    %160 = vector.load %arg22[%c0_100, %c0_101] : memref<16x64xf32, #tpu.memory_space<vmem>>, vector<16x64xf32>
    tpu.vector_store %arg22[%c0_100, %c0_101], %159 {strides = array<i32>} : memref<16x64xf32, #tpu.memory_space<vmem>>, vector<16x64xf32>,
    return
  }
}

</mosaic_0001>

<llo_original>
// kernel: gnn_forward.1
$region0: #{gnn_forward.1}
  #allocation0 [shape = 'u32[]', space=smem, size = 0x4, offset = 0x4, fixed_abs, tag = 'smem constant byte address 0x4 - core index']
  #allocation1 [shape = 'u32[144,128]{1,0:T(1,128)}', space=vmem, size = 0x12000, scoped, tag = 'internal scratch']
  %s0 = inlined_call_operand.vmem [shape: f32[16,32], index: 0, kind: input, shape index: {}]
  %s1 = inlined_call_operand.vmem [shape: s32[1,24], index: 1, kind: input, shape index: {}]
  %s2 = inlined_call_operand.vmem [shape: s32[1,24], index: 2, kind: input, shape index: {}]
  %s3 = inlined_call_operand.vmem [shape: s32[24,1], index: 3, kind: input, shape index: {}]
  %s4 = inlined_call_operand.vmem [shape: s32[24,1], index: 4, kind: input, shape index: {}]
  %s5 = inlined_call_operand.vmem [shape: f32[16,1], index: 5, kind: input, shape index: {}]
  %s6 = inlined_call_operand.vmem [shape: f32[16,1], index: 6, kind: input, shape index: {}]
  %s7 = inlined_call_operand.vmem [shape: bf16[32,64], index: 7, kind: input, shape index: {}]
  %s8 = inlined_call_operand.vmem [shape: bf16[32,64], index: 8, kind: input, shape index: {}]
  %s9 = inlined_call_operand.vmem [shape: f32[1,64], index: 9, kind: input, shape index: {}]
  %s10 = inlined_call_operand.vmem [shape: bf16[64,32], index: 10, kind: input, shape index: {}]
  %s11 = inlined_call_operand.vmem [shape: f32[1,32], index: 11, kind: input, shape index: {}]
  %s12 = inlined_call_operand.vmem [shape: bf16[64,32], index: 12, kind: input, shape index: {}]
  %s13 = inlined_call_operand.vmem [shape: f32[1,32], index: 13, kind: input, shape index: {}]
  %s14 = inlined_call_operand.vmem [shape: bf16[32,64], index: 14, kind: input, shape index: {}]
  %s15 = inlined_call_operand.vmem [shape: bf16[32,64], index: 15, kind: input, shape index: {}]
  %s16 = inlined_call_operand.vmem [shape: bf16[32,64], index: 16, kind: input, shape index: {}]
  %s17 = inlined_call_operand.vmem [shape: f32[1,64], index: 17, kind: input, shape index: {}]
  %s18 = inlined_call_operand.vmem [shape: bf16[64,32], index: 18, kind: input, shape index: {}]
  %s19 = inlined_call_operand.vmem [shape: f32[1,32], index: 19, kind: input, shape index: {}]
  %s20 = inlined_call_operand.vmem [shape: bf16[32,64], index: 20, kind: input, shape index: {}]
  %s21 = inlined_call_operand.vmem [shape: f32[1,64], index: 21, kind: input, shape index: {}]
  %s22 = inlined_call_operand.hbm [shape: f32[16,64], index: 22, kind: output, shape index: {}]
  %s23 = sld [smem:[#allocation0]]
  $region98: #{gnn_forward.1} parent=0
    _
  %s25 = ssub.s32 1, %s23
  %s26 = scalar_select 0, %s25, %s23
  $region1: #{gnn_forward.1} parent=0
    #allocation2 [shape = 'u8[8192]{0}', space=vmem, size = 0x2000, scoped, tag = 'output window, operand 0, single buffered']
    #allocation3 [shape = 's32[1]{0}', space=sflag, size = 0x4, scoped, tag = 'scoped memory for gnn_forward.1']
    %27 = vsyncpa [#allocation3], 0
    // Predicated region
    $region2: #{gnn_forward.1} parent=1 // pred_check
      _
    $region3: #{gnn_forward.1} parent=1 // pred_check_branch
      %29 = sbr.rel (0) target = $region5
    $region4: #{gnn_forward.1} parent=1 // pred_region
      _
    $region5: #{gnn_forward.1} parent=1 // pred_fallthru
      _
    // Predicated region
    $region6: #{gnn_forward.1} parent=1 // pred_check
      _
    $region7: #{gnn_forward.1} parent=1 // pred_check_branch
      %31 = sbr.rel (0) target = $region9
    $region8: #{gnn_forward.1} parent=1 // pred_region
      _
    $region9: #{gnn_forward.1} parent=1 // pred_fallthru
      _
    // Predicated region
    $region10: #{gnn_forward.1} parent=1 // pred_check
      _
    $region11: #{gnn_forward.1} parent=1 // pred_check_branch
      %33 = sbr.rel (0) target = $region13
    $region12: #{gnn_forward.1} parent=1 // pred_region
      _
    $region13: #{gnn_forward.1} parent=1 // pred_fallthru
      _
    // Predicated region
    $region14: #{gnn_forward.1} parent=1 // pred_check
      _
    $region15: #{gnn_forward.1} parent=1 // pred_check_branch
      %35 = sbr.rel (0) target = $region17
    $region16: #{gnn_forward.1} parent=1 // pred_region
      _
    $region17: #{gnn_forward.1} parent=1 // pred_fallthru
      _
    // Predicated region
    $region18: #{gnn_forward.1} parent=1 // pred_check
      _
    $region19: #{gnn_forward.1} parent=1 // pred_check_branch
      %37 = sbr.rel (0) target = $region21
    $region20: #{gnn_forward.1} parent=1 // pred_region
      _
    $region21: #{gnn_forward.1} parent=1 // pred_fallthru
      _
    // Predicated region
    $region22: #{gnn_forward.1} parent=1 // pred_check
      _
    $region23: #{gnn_forward.1} parent=1 // pred_check_branch
      %39 = sbr.rel (0) target = $region25
    $region24: #{gnn_forward.1} parent=1 // pred_region
      _
    $region25: #{gnn_forward.1} parent=1 // pred_fallthru
      _
    // Predicated region
    $region26: #{gnn_forward.1} parent=1 // pred_check
      _
    $region27: #{gnn_forward.1} parent=1 // pred_check_branch
      %41 = sbr.rel (0) target = $region29
    $region28: #{gnn_forward.1} parent=1 // pred_region
      _
    $region29: #{gnn_forward.1} parent=1 // pred_fallthru
      _
    // Predicated region
    $region30: #{gnn_forward.1} parent=1 // pred_check
      _
    $region31: #{gnn_forward.1} parent=1 // pred_check_branch
      %43 = sbr.rel (0) target = $region33
    $region32: #{gnn_forward.1} parent=1 // pred_region
      _
    $region33: #{gnn_forward.1} parent=1 // pred_fallthru
      _
    // Predicated region
    $region34: #{gnn_forward.1} parent=1 // pred_check
      _
    $region35: #{gnn_forward.1} parent=1 // pred_check_branch
      %45 = sbr.rel (0) target = $region37
    $region36: #{gnn_forward.1} parent=1 // pred_region
      _
    $region37: #{gnn_forward.1} parent=1 // pred_fallthru
      _
    // Predicated region
    $region38: #{gnn_forward.1} parent=1 // pred_check
      _
    $region39: #{gnn_forward.1} parent=1 // pred_check_branch
      %47 = sbr.rel (0) target = $region41
    $region40: #{gnn_forward.1} parent=1 // pred_region
      _
    $region41: #{gnn_forward.1} parent=1 // pred_fallthru
      _
    // Predicated region
    $region42: #{gnn_forward.1} parent=1 // pred_check
      _
    $region43: #{gnn_forward.1} parent=1 // pred_check_branch
      %49 = sbr.rel (0) target = $region45
    $region44: #{gnn_forward.1} parent=1 // pred_region
      _
    $region45: #{gnn_forward.1} parent=1 // pred_fallthru
      _
    // Predicated region
    $region46: #{gnn_forward.1} parent=1 // pred_check
      _
    $region47: #{gnn_forward.1} parent=1 // pred_check_branch
      %51 = sbr.rel (0) target = $region49
    $region48: #{gnn_forward.1} parent=1 // pred_region
      _
    $region49: #{gnn_forward.1} parent=1 // pred_fallthru
      _
    // Predicated region
    $region50: #{gnn_forward.1} parent=1 // pred_check
      _
    $region51: #{gnn_forward.1} parent=1 // pred_check_branch
      %53 = sbr.rel (0) target = $region53
    $region52: #{gnn_forward.1} parent=1 // pred_region
      _
    $region53: #{gnn_forward.1} parent=1 // pred_fallthru
      _
    // Predicated region
    $region54: #{gnn_forward.1} parent=1 // pred_check
      _
    $region55: #{gnn_forward.1} parent=1 // pred_check_branch
      %55 = sbr.rel (0) target = $region57
    $region56: #{gnn_forward.1} parent=1 // pred_region
      _
    $region57: #{gnn_forward.1} parent=1 // pred_fallthru
      _
    // Predicated region
    $region58: #{gnn_forward.1} parent=1 // pred_check
      _
    $region59: #{gnn_forward.1} parent=1 // pred_check_branch
      %57 = sbr.rel (0) target = $region61
    $region60: #{gnn_forward.1} parent=1 // pred_region
      _
    $region61: #{gnn_forward.1} parent=1 // pred_fallthru
      _
    // Predicated region
    $region62: #{gnn_forward.1} parent=1 // pred_check
      _
    $region63: #{gnn_forward.1} parent=1 // pred_check_branch
      %59 = sbr.rel (0) target = $region65
    $region64: #{gnn_forward.1} parent=1 // pred_region
      _
    $region65: #{gnn_forward.1} parent=1 // pred_fallthru
      _
    // Predicated region
    $region66: #{gnn_forward.1} parent=1 // pred_check
      _
    $region67: #{gnn_forward.1} parent=1 // pred_check_branch
      %61 = sbr.rel (0) target = $region69
    $region68: #{gnn_forward.1} parent=1 // pred_region
      _
    $region69: #{gnn_forward.1} parent=1 // pred_fallthru
      _
    // Predicated region
    $region70: #{gnn_forward.1} parent=1 // pred_check
      _
    $region71: #{gnn_forward.1} parent=1 // pred_check_branch
      %63 = sbr.rel (0) target = $region73
    $region72: #{gnn_forward.1} parent=1 // pred_region
      _
    $region73: #{gnn_forward.1} parent=1 // pred_fallthru
      _
    // Predicated region
    $region74: #{gnn_forward.1} parent=1 // pred_check
      _
    $region75: #{gnn_forward.1} parent=1 // pred_check_branch
      %65 = sbr.rel (0) target = $region77
    $region76: #{gnn_forward.1} parent=1 // pred_region
      _
    $region77: #{gnn_forward.1} parent=1 // pred_fallthru
      _
    // Predicated region
    $region78: #{gnn_forward.1} parent=1 // pred_check
      _
    $region79: #{gnn_forward.1} parent=1 // pred_check_branch
      %67 = sbr.rel (0) target = $region81
    $region80: #{gnn_forward.1} parent=1 // pred_region
      _
    $region81: #{gnn_forward.1} parent=1 // pred_fallthru
      _
    // Predicated region
    $region82: #{gnn_forward.1} parent=1 // pred_check
      _
    $region83: #{gnn_forward.1} parent=1 // pred_check_branch
      %69 = sbr.rel (0) target = $region85
    $region84: #{gnn_forward.1} parent=1 // pred_region
      _
    $region85: #{gnn_forward.1} parent=1 // pred_fallthru
      _
    // Predicated region
    $region86: #{gnn_forward.1} parent=1 // pred_check
      _
    $region87: #{gnn_forward.1} parent=1 // pred_check_branch
      %71 = sbr.rel (0) target = $region89
    $region88: #{gnn_forward.1} parent=1 // pred_region
      _
    $region89: #{gnn_forward.1} parent=1 // pred_fallthru
      _
    %v73 = vlaneseq
    %v74 = vand.u32 %v73, 127
    %vm75 = vcmp.lt.s32.totalorder %v74, 16
    %v76 = vld [vmem:[%s4] sm:$0xff]
    %v77 = vld [vmem:[%s4 + $0x8] sm:$0xff]
    %v78 = vld [vmem:[%s4 + $0x10] sm:$0xff]
    %v79 = vld [vmem:[%s3] sm:$0xff]
    %v80 = vld [vmem:[%s3 + $0x8] sm:$0xff]
    %v81 = vld [vmem:[%s3 + $0x10] sm:$0xff]
    %v82 = vadd.s32 %v79, 16
    %v83 = vadd.s32 %v80, 16
    %v84 = vadd.s32 %v81, 16
    %85 = vset.pattern.permute.xlu0 0
    %86 = vperm.xlu0 %85, %v76
    %v87 = vpop.permute.xlu0 %86
    %88 = vset.pattern.permute.xlu0 0
    %89 = vperm.xlu0 %88, %v77
    %v90 = vpop.permute.xlu0 %89
    %91 = vset.pattern.permute.xlu0 0
    %92 = vperm.xlu0 %91, %v78
    %v93 = vpop.permute.xlu0 %92
    %94 = vset.pattern.permute.xlu0 0
    %95 = vperm.xlu0 %94, %v82
    %v96 = vpop.permute.xlu0 %95
    %97 = vset.pattern.permute.xlu0 0
    %98 = vperm.xlu0 %97, %v83
    %v99 = vpop.permute.xlu0 %98
    %100 = vset.pattern.permute.xlu0 0
    %101 = vperm.xlu0 %100, %v84
    %v102 = vpop.permute.xlu0 %101
    %v103 = vsel %vm75, %v87, %v96
    %v104 = vsel %vm75, %v90, %v99
    %v105 = vsel %vm75, %v93, %v102
    %vm106 = vcmp.eq.s32.totalorder %v74, %v103
    %vm107 = vcmp.eq.s32.totalorder %v74, %v104
    %vm108 = vcmp.eq.s32.totalorder %v74, %v105
    %v109 = vsel %vm106, 1, 0
    %v110 = vsel %vm107, 1, 0
    %v111 = vsel %vm108, 1, 0
    %v112 = vcvt.s32.f32 %v109
    %v113 = vcvt.s32.f32 %v110
    %v114 = vcvt.s32.f32 %v111
    %v115 = vpack.c.bf16 %v113, %v112
    %v116 = vpack.c.bf16 %v114, %v114
    %v117 = vlaneseq
    %v118 = vshrl.u32 %v117, 7
    %v119 = vadd.s32 %v118, 8
    %v120 = vld [vmem:[%s2] sm:$0x1]
    %v121 = vlaneseq
    %v122 = vshrl.u32 %v121, 7
    %v123 = vsub.s32 0, %v122
    %v124 = vrot.slane %v120, %v123
    %vm125 = vcmp.eq.s32.totalorder %v118, %v124
    %vm126 = vcmp.eq.s32.totalorder %v119, %v124
    %v127 = vsel %vm125, 1, 0
    %v128 = vsel %vm126, 1, 0
    %v129 = vcvt.s32.f32 %v127
    %v130 = vcvt.s32.f32 %v128
    %v131 = vpack.c.bf16 %v130, %v129
    %v132 = vld [vmem:[%s1] sm:$0x1]
    %v133 = vlaneseq
    %v134 = vshrl.u32 %v133, 7
    %v135 = vsub.s32 0, %v134
    %v136 = vrot.slane %v132, %v135
    %vm137 = vcmp.eq.s32.totalorder %v118, %v136
    %vm138 = vcmp.eq.s32.totalorder %v119, %v136
    %v139 = vsel %vm137, 1, 0
    %v140 = vsel %vm138, 1, 0
    %v141 = vcvt.s32.f32 %v139
    %v142 = vcvt.s32.f32 %v140
    %v143 = vpack.c.bf16 %v142, %v141
    %v144 = vld [vmem:[%s5] sm:$0xff]
    %v145 = vld [vmem:[%s5 + $0x8] sm:$0xff]
    %v146 = vld [vmem:[%s6] sm:$0xff]
    %v147 = vld [vmem:[%s6 + $0x8] sm:$0xff]
    %v148 = vld [vmem:[%s0] sm:$0xff]
    %v149 = vld [vmem:[%s0 + $0x8] sm:$0xff]
    %v150 = vld [vmem:[%s7] sm:$0xf]
    %v151 = vld [vmem:[%s7 + $0x4] sm:$0xf]
    %v152 = vld [vmem:[%s7 + $0x8] sm:$0xf]
    %v153 = vld [vmem:[%s7 + $0xc] sm:$0xf]
    %v154 = vpack.c.bf16 %v149, %v148
    %v159 = vunpack.c.l.b16 %v150
    %v160 = vunpack.c.l.b16 %v151
    %v161 = vunpack.c.l.b16 %v152
    %v162 = vunpack.c.l.b16 %v153
    %v163 = vpack.c.b16 %v160, %v159
    %v164 = vpack.c.b16 %v162, %v161
    %vm167 = vcmask 261120
    %v169 = vsel %vm167, %v154, 0
    %171 = vmatprep.subr.bf16.mxu0 0
    %172 = vmatpush1.bf16.msra.mxu0 0
    %173 = vmatprep.subr.bf16.mxu0 0
    %174 = vmatpush1.bf16.msra.mxu0 0
    %175 = vmatprep.subr.bf16.mxu0 0
    %176 = vmatpush1.bf16.msra.mxu0 0
    %177 = vmatprep.subr.bf16.mxu0 0
    %178 = vmatpush1.bf16.msra.mxu0 0
    %179 = vmatprep.subr.bf16.mxu0 0
    %180 = vmatpush1.bf16.msra.mxu0 0
    %181 = vmatprep.subr.bf16.mxu0 0
    %182 = vmatpush1.bf16.msra.mxu0 0
    %183 = vmatprep.subr.bf16.mxu0 0
    %184 = vmatpush1.bf16.msra.mxu0 %v164
    %185 = vmatprep.subr.bf16.mxu0 0
    %186 = vmatpush1.bf16.msra.mxu0 %v163
    %187 = vmatprep.subr.bf16.mxu0 0
    %188 = vmatpush2.bf16.msra.mxu0 0
    %189 = vmatprep.subr.bf16.mxu0 0
    %190 = vmatpush2.bf16.msra.mxu0 0
    %191 = vmatprep.subr.bf16.mxu0 0
    %192 = vmatpush2.bf16.msra.mxu0 0
    %193 = vmatprep.subr.bf16.mxu0 0
    %194 = vmatpush2.bf16.msra.mxu0 0
    %195 = vmatprep.subr.bf16.mxu0 0
    %196 = vmatpush2.bf16.msra.mxu0 0
    %197 = vmatprep.subr.bf16.mxu0 0
    %198 = vmatpush2.bf16.msra.mxu0 0
    %199 = vmatprep.subr.bf16.mxu0 0
    %200 = vmatpush2.bf16.msra.mxu0 0
    %201 = vmatprep.subr.bf16.mxu0 0
    %202 = vmatpush2.bf16.msra.mxu0 0
    %203 = vmatprep.mubr.bf16.mxu0 0
    %204 = vmatmul.mubr.bf16.gmra.mxu0 %v169
    %v205 = vpop.f32.mrf.mxu0
    %v206 = vadd.f32 0.0, %v205
    %v207 = vpop.f32.mrf.mxu0
    %v208 = vpop.f32.mrf.mxu0
    %v209 = vadd.f32 0.0, %v208
    %v210 = vpop.f32.mrf.mxu0
    %211 = vdwg.mxu0
    %v212 = vld [vmem:[%s8] sm:$0xf]
    %v213 = vld [vmem:[%s8 + $0x4] sm:$0xf]
    %v214 = vld [vmem:[%s8 + $0x8] sm:$0xf]
    %v215 = vld [vmem:[%s8 + $0xc] sm:$0xf]
    %v220 = vunpack.c.l.b16 %v212
    %v221 = vunpack.c.l.b16 %v213
    %v222 = vunpack.c.l.b16 %v214
    %v223 = vunpack.c.l.b16 %v215
    %v224 = vpack.c.b16 %v221, %v220
    %v225 = vpack.c.b16 %v223, %v222
    %228 = vmatprep.subr.bf16.mxu0 0
    %229 = vmatpush1.bf16.msra.mxu0 0
    %230 = vmatprep.subr.bf16.mxu0 0
    %231 = vmatpush1.bf16.msra.mxu0 0
    %232 = vmatprep.subr.bf16.mxu0 0
    %233 = vmatpush1.bf16.msra.mxu0 0
    %234 = vmatprep.subr.bf16.mxu0 0
    %235 = vmatpush1.bf16.msra.mxu0 0
    %236 = vmatprep.subr.bf16.mxu0 0
    %237 = vmatpush1.bf16.msra.mxu0 0
    %238 = vmatprep.subr.bf16.mxu0 0
    %239 = vmatpush1.bf16.msra.mxu0 0
    %240 = vmatprep.subr.bf16.mxu0 0
    %241 = vmatpush1.bf16.msra.mxu0 %v225
    %242 = vmatprep.subr.bf16.mxu0 0
    %243 = vmatpush1.bf16.msra.mxu0 %v224
    %244 = vmatprep.subr.bf16.mxu0 0
    %245 = vmatpush2.bf16.msra.mxu0 0
    %246 = vmatprep.subr.bf16.mxu0 0
    %247 = vmatpush2.bf16.msra.mxu0 0
    %248 = vmatprep.subr.bf16.mxu0 0
    %249 = vmatpush2.bf16.msra.mxu0 0
    %250 = vmatprep.subr.bf16.mxu0 0
    %251 = vmatpush2.bf16.msra.mxu0 0
    %252 = vmatprep.subr.bf16.mxu0 0
    %253 = vmatpush2.bf16.msra.mxu0 0
    %254 = vmatprep.subr.bf16.mxu0 0
    %255 = vmatpush2.bf16.msra.mxu0 0
    %256 = vmatprep.subr.bf16.mxu0 0
    %257 = vmatpush2.bf16.msra.mxu0 0
    %258 = vmatprep.subr.bf16.mxu0 0
    %259 = vmatpush2.bf16.msra.mxu0 0
    %260 = vmatprep.mubr.bf16.mxu0 0
    %261 = vmatmul.mubr.bf16.gmra.mxu0 %v169
    %v262 = vpop.f32.mrf.mxu0
    %v263 = vadd.f32 0.0, %v262
    %v264 = vpop.f32.mrf.mxu0
    %v265 = vpop.f32.mrf.mxu0
    %v266 = vadd.f32 0.0, %v265
    %v267 = vpop.f32.mrf.mxu0
    %268 = vdwg.mxu0
    %v269 = vpack.c.bf16 %v209, %v206
    %v270 = vpack.c.bf16 %v266, %v263
    %v271 = vld [vmem:[%s9] sm:$0x1]
    %v273 = vlaneseq
    %v274 = vshrl.u32 %v273, 7
    %v275 = vsub.s32 0, %v274
    %v276 = vrot.slane %v271, %v275
    %v279 = vsel %vm167, %v115, 0
    %v282 = vsel %vm167, %v116, 0
    %284 = vmatprep.subr.bf16.mxu0 0
    %285 = vmatpush1.bf16.msra.mxu0 0
    %286 = vmatprep.subr.bf16.mxu0 0
    %287 = vmatpush1.bf16.msra.mxu0 0
    %288 = vmatprep.subr.bf16.mxu0 0
    %289 = vmatpush1.bf16.msra.mxu0 0
    %290 = vmatprep.subr.bf16.mxu0 0
    %291 = vmatpush1.bf16.msra.mxu0 0
    %292 = vmatprep.subr.bf16.mxu0 0
    %293 = vmatpush1.bf16.msra.mxu0 0
    %294 = vmatprep.subr.bf16.mxu0 0
    %295 = vmatpush1.bf16.msra.mxu0 0
    %296 = vmatprep.subr.bf16.mxu0 0
    %297 = vmatpush1.bf16.msra.mxu0 %v270
    %298 = vmatprep.subr.bf16.mxu0 0
    %299 = vmatpush1.bf16.msra.mxu0 %v269
    %300 = vmatprep.subr.bf16.mxu0 0
    %301 = vmatpush2.bf16.msra.mxu0 0
    %302 = vmatprep.subr.bf16.mxu0 0
    %303 = vmatpush2.bf16.msra.mxu0 0
    %304 = vmatprep.subr.bf16.mxu0 0
    %305 = vmatpush2.bf16.msra.mxu0 0
    %306 = vmatprep.subr.bf16.mxu0 0
    %307 = vmatpush2.bf16.msra.mxu0 0
    %308 = vmatprep.subr.bf16.mxu0 0
    %309 = vmatpush2.bf16.msra.mxu0 0
    %310 = vmatprep.subr.bf16.mxu0 0
    %311 = vmatpush2.bf16.msra.mxu0 0
    %312 = vmatprep.subr.bf16.mxu0 0
    %313 = vmatpush2.bf16.msra.mxu0 0
    %314 = vmatprep.subr.bf16.mxu0 0
    %315 = vmatpush2.bf16.msra.mxu0 0
    %316 = vmatprep.mubr.bf16.mxu0 0
    %317 = vmatmul.mubr.bf16.gmra.mxu0 %v279
    %v318 = vpop.f32.mrf.mxu0
    %v319 = vadd.f32 %v276, %v318
    %v320 = vpop.f32.mrf.mxu0
    %v321 = vpop.f32.mrf.mxu0
    %v322 = vadd.f32 %v276, %v321
    %v323 = vpop.f32.mrf.mxu0
    %324 = vmatprep.mubr.bf16.mxu0 0
    %325 = vmatmul.mubr.bf16.gmra.mxu0 %v282
    %v326 = vpop.f32.mrf.mxu0
    %v327 = vadd.f32 %v276, %v326
    %v328 = vpop.f32.mrf.mxu0
    %v329 = vpop.f32.mrf.mxu0
    %v330 = vpop.f32.mrf.mxu0
    %331 = vdwg.mxu0
    %v332 = vmax.f32 %v319, 0.0
    %v333 = vmax.f32 %v322, 0.0
    %v334 = vmax.f32 %v327, 0.0
    %v335 = vld [vmem:[%s10] sm:$0xf]
    %v336 = vld [vmem:[%s10 + $0x4] sm:$0xf]
    %v337 = vld [vmem:[%s10 + $0x8] sm:$0xf]
    %v338 = vld [vmem:[%s10 + $0xc] sm:$0xf]
    %v339 = vld [vmem:[%s10 + $0x10] sm:$0xf]
    %v340 = vld [vmem:[%s10 + $0x14] sm:$0xf]
    %v341 = vld [vmem:[%s10 + $0x18] sm:$0xf]
    %v342 = vld [vmem:[%s10 + $0x1c] sm:$0xf]
    %v343 = vpack.c.bf16 %v333, %v332
    %v344 = vpack.c.bf16 %v334, %v334
    %v345 = vld [vmem:[%s11] sm:$0x1]
    %v347 = vlaneseq
    %v348 = vshrl.u32 %v347, 7
    %v349 = vsub.s32 0, %v348
    %v350 = vrot.slane %v345, %v349
    %v360 = vunpack.c.l.b16 %v335
    %v361 = vunpack.c.l.b16 %v336
    %v362 = vunpack.c.l.b16 %v337
    %v363 = vunpack.c.l.b16 %v338
    %v364 = vunpack.c.l.b16 %v339
    %v365 = vunpack.c.l.b16 %v340
    %v366 = vunpack.c.l.b16 %v341
    %v367 = vunpack.c.l.b16 %v342
    %v368 = vpack.c.b16 %v361, %v360
    %v369 = vpack.c.b16 %v363, %v362
    %v370 = vpack.c.b16 %v365, %v364
    %v371 = vpack.c.b16 %v367, %v366
    %vm376 = vcmask 523264
    %v378 = vsel %vm376, %v343, 0
    %v381 = vsel %vm376, %v344, 0
    %383 = vmatprep.subr.bf16.mxu0 0
    %384 = vmatpush1.bf16.msra.mxu0 0
    %385 = vmatprep.subr.bf16.mxu0 0
    %386 = vmatpush1.bf16.msra.mxu0 0
    %387 = vmatprep.subr.bf16.mxu0 0
    %388 = vmatpush1.bf16.msra.mxu0 0
    %389 = vmatprep.subr.bf16.mxu0 0
    %390 = vmatpush1.bf16.msra.mxu0 0
    %391 = vmatprep.subr.bf16.mxu0 0
    %392 = vmatpush1.bf16.msra.mxu0 %v371
    %393 = vmatprep.subr.bf16.mxu0 0
    %394 = vmatpush1.bf16.msra.mxu0 %v370
    %395 = vmatprep.subr.bf16.mxu0 0
    %396 = vmatpush1.bf16.msra.mxu0 %v369
    %397 = vmatprep.subr.bf16.mxu0 0
    %398 = vmatpush1.bf16.msra.mxu0 %v368
    %399 = vmatprep.subr.bf16.mxu0 0
    %400 = vmatpush2.bf16.msra.mxu0 0
    %401 = vmatprep.subr.bf16.mxu0 0
    %402 = vmatpush2.bf16.msra.mxu0 0
    %403 = vmatprep.subr.bf16.mxu0 0
    %404 = vmatpush2.bf16.msra.mxu0 0
    %405 = vmatprep.subr.bf16.mxu0 0
    %406 = vmatpush2.bf16.msra.mxu0 0
    %407 = vmatprep.subr.bf16.mxu0 0
    %408 = vmatpush2.bf16.msra.mxu0 0
    %409 = vmatprep.subr.bf16.mxu0 0
    %410 = vmatpush2.bf16.msra.mxu0 0
    %411 = vmatprep.subr.bf16.mxu0 0
    %412 = vmatpush2.bf16.msra.mxu0 0
    %413 = vmatprep.subr.bf16.mxu0 0
    %414 = vmatpush2.bf16.msra.mxu0 0
    %415 = vmatprep.mubr.bf16.mxu0 0
    %416 = vmatmul.mubr.bf16.gmra.mxu0 %v378
    %v417 = vpop.f32.mrf.mxu0
    %v418 = vadd.f32 %v350, %v417
    %v419 = vpop.f32.mrf.mxu0
    %v420 = vpop.f32.mrf.mxu0
    %v421 = vadd.f32 %v350, %v420
    %v422 = vpop.f32.mrf.mxu0
    %423 = vmatprep.mubr.bf16.mxu0 0
    %424 = vmatmul.mubr.bf16.gmra.mxu0 %v381
    %v425 = vpop.f32.mrf.mxu0
    %v426 = vadd.f32 %v350, %v425
    %v427 = vpop.f32.mrf.mxu0
    %v428 = vpop.f32.mrf.mxu0
    %v429 = vpop.f32.mrf.mxu0
    %430 = vdwg.mxu0
    %v431 = vmax.f32 %v418, 0.0
    %v432 = vmax.f32 %v421, 0.0
    %v433 = vmax.f32 %v426, 0.0
    %v434 = vld [vmem:[%s12] sm:$0xf]
    %v435 = vld [vmem:[%s12 + $0x4] sm:$0xf]
    %v436 = vld [vmem:[%s12 + $0x8] sm:$0xf]
    %v437 = vld [vmem:[%s12 + $0xc] sm:$0xf]
    %v438 = vld [vmem:[%s12 + $0x10] sm:$0xf]
    %v439 = vld [vmem:[%s12 + $0x14] sm:$0xf]
    %v440 = vld [vmem:[%s12 + $0x18] sm:$0xf]
    %v441 = vld [vmem:[%s12 + $0x1c] sm:$0xf]
    %v442 = vld [vmem:[%s13] sm:$0x1]
    %v444 = vlaneseq
    %v445 = vshrl.u32 %v444, 7
    %v446 = vsub.s32 0, %v445
    %v447 = vrot.slane %v442, %v446
    %v457 = vunpack.c.l.b16 %v434
    %v458 = vunpack.c.l.b16 %v435
    %v459 = vunpack.c.l.b16 %v436
    %v460 = vunpack.c.l.b16 %v437
    %v461 = vunpack.c.l.b16 %v438
    %v462 = vunpack.c.l.b16 %v439
    %v463 = vunpack.c.l.b16 %v440
    %v464 = vunpack.c.l.b16 %v441
    %v465 = vpack.c.b16 %v458, %v457
    %v466 = vpack.c.b16 %v460, %v459
    %v467 = vpack.c.b16 %v462, %v461
    %v468 = vpack.c.b16 %v464, %v463
    %473 = vmatprep.subr.bf16.mxu0 0
    %474 = vmatpush1.bf16.msra.mxu0 0
    %475 = vmatprep.subr.bf16.mxu0 0
    %476 = vmatpush1.bf16.msra.mxu0 0
    %477 = vmatprep.subr.bf16.mxu0 0
    %478 = vmatpush1.bf16.msra.mxu0 0
    %479 = vmatprep.subr.bf16.mxu0 0
    %480 = vmatpush1.bf16.msra.mxu0 0
    %481 = vmatprep.subr.bf16.mxu0 0
    %482 = vmatpush1.bf16.msra.mxu0 %v468
    %483 = vmatprep.subr.bf16.mxu0 0
    %484 = vmatpush1.bf16.msra.mxu0 %v467
    %485 = vmatprep.subr.bf16.mxu0 0
    %486 = vmatpush1.bf16.msra.mxu0 %v466
    %487 = vmatprep.subr.bf16.mxu0 0
    %488 = vmatpush1.bf16.msra.mxu0 %v465
    %489 = vmatprep.subr.bf16.mxu0 0
    %490 = vmatpush2.bf16.msra.mxu0 0
    %491 = vmatprep.subr.bf16.mxu0 0
    %492 = vmatpush2.bf16.msra.mxu0 0
    %493 = vmatprep.subr.bf16.mxu0 0
    %494 = vmatpush2.bf16.msra.mxu0 0
    %495 = vmatprep.subr.bf16.mxu0 0
    %496 = vmatpush2.bf16.msra.mxu0 0
    %497 = vmatprep.subr.bf16.mxu0 0
    %498 = vmatpush2.bf16.msra.mxu0 0
    %499 = vmatprep.subr.bf16.mxu0 0
    %500 = vmatpush2.bf16.msra.mxu0 0
    %501 = vmatprep.subr.bf16.mxu0 0
    %502 = vmatpush2.bf16.msra.mxu0 0
    %503 = vmatprep.subr.bf16.mxu0 0
    %504 = vmatpush2.bf16.msra.mxu0 0
    %505 = vmatprep.mubr.bf16.mxu0 0
    %506 = vmatmul.mubr.bf16.gmra.mxu0 %v378
    %v507 = vpop.f32.mrf.mxu0
    %v508 = vadd.f32 %v447, %v507
    %v509 = vpop.f32.mrf.mxu0
    %v510 = vpop.f32.mrf.mxu0
    %v511 = vadd.f32 %v447, %v510
    %v512 = vpop.f32.mrf.mxu0
    %513 = vmatprep.mubr.bf16.mxu0 0
    %514 = vmatmul.mubr.bf16.gmra.mxu0 %v381
    %v515 = vpop.f32.mrf.mxu0
    %v516 = vadd.f32 %v447, %v515
    %v517 = vpop.f32.mrf.mxu0
    %v518 = vpop.f32.mrf.mxu0
    %v519 = vpop.f32.mrf.mxu0
    %520 = vdwg.mxu0
    %v521 = vmax.f32 %v508, 0.0
    %v522 = vmax.f32 %v511, 0.0
    %v523 = vmax.f32 %v516, 0.0
    %v524 = vpack.c.bf16 %v432, %v431
    %v525 = vpack.c.bf16 %v433, %v433
    %vm526 = vcmask 195584
    %v528 = vsel %vm526, %v131, 0
    %vm530 = vcmask 1043456
    %v532 = vsel %vm530, %v525, 0
    %534 = vmatprep.subr.bf16.mxu0 0
    %535 = vmatpush1.bf16.msra.mxu0 0
    %536 = vmatprep.subr.bf16.mxu0 0
    %537 = vmatpush1.bf16.msra.mxu0 0
    %538 = vmatprep.subr.bf16.mxu0 0
    %539 = vmatpush1.bf16.msra.mxu0 0
    %540 = vmatprep.subr.bf16.mxu0 0
    %541 = vmatpush1.bf16.msra.mxu0 0
    %542 = vmatprep.subr.bf16.mxu0 0
    %543 = vmatpush1.bf16.msra.mxu0 0
    %544 = vmatprep.subr.bf16.mxu0 0
    %545 = vmatpush1.bf16.msra.mxu0 0
    %546 = vmatprep.subr.bf16.mxu0 0
    %547 = vmatpush1.bf16.msra.mxu0 %v532
    %548 = vmatprep.subr.bf16.mxu0 0
    %549 = vmatpush1.bf16.msra.mxu0 %v524
    %550 = vmatprep.subr.bf16.mxu0 0
    %551 = vmatpush2.bf16.msra.mxu0 0
    %552 = vmatprep.subr.bf16.mxu0 0
    %553 = vmatpush2.bf16.msra.mxu0 0
    %554 = vmatprep.subr.bf16.mxu0 0
    %555 = vmatpush2.bf16.msra.mxu0 0
    %556 = vmatprep.subr.bf16.mxu0 0
    %557 = vmatpush2.bf16.msra.mxu0 0
    %558 = vmatprep.subr.bf16.mxu0 0
    %559 = vmatpush2.bf16.msra.mxu0 0
    %560 = vmatprep.subr.bf16.mxu0 0
    %561 = vmatpush2.bf16.msra.mxu0 0
    %562 = vmatprep.subr.bf16.mxu0 0
    %563 = vmatpush2.bf16.msra.mxu0 0
    %564 = vmatprep.subr.bf16.mxu0 0
    %565 = vmatpush2.bf16.msra.mxu0 0
    %566 = vmatprep.mubr.bf16.mxu0 0
    %567 = vmatmul.mubr.bf16.gmra.mxu0 %v528
    %v568 = vpop.f32.mrf.mxu0
    %v569 = vadd.f32 0.0, %v568
    %v570 = vpop.f32.mrf.mxu0
    %v571 = vpop.f32.mrf.mxu0
    %v572 = vadd.f32 0.0, %v571
    %v573 = vpop.f32.mrf.mxu0
    %574 = vdwg.mxu0
    %576 = vset.pattern.permute.xlu0 0
    %577 = vperm.xlu0 %576, %v144
    %v578 = vpop.permute.xlu0 %577
    %581 = vset.pattern.permute.xlu0 0
    %582 = vperm.xlu0 %581, %v145
    %v583 = vpop.permute.xlu0 %582
    %v585 = vmul.f32 %v569, %v578
    %v586 = vmul.f32 %v572, %v583
    %v587 = vpack.c.bf16 %v522, %v521
    %v588 = vpack.c.bf16 %v523, %v523
    %v590 = vsel %vm526, %v143, 0
    %v593 = vsel %vm530, %v588, 0
    %595 = vmatprep.subr.bf16.mxu0 0
    %596 = vmatpush1.bf16.msra.mxu0 0
    %597 = vmatprep.subr.bf16.mxu0 0
    %598 = vmatpush1.bf16.msra.mxu0 0
    %599 = vmatprep.subr.bf16.mxu0 0
    %600 = vmatpush1.bf16.msra.mxu0 0
    %601 = vmatprep.subr.bf16.mxu0 0
    %602 = vmatpush1.bf16.msra.mxu0 0
    %603 = vmatprep.subr.bf16.mxu0 0
    %604 = vmatpush1.bf16.msra.mxu0 0
    %605 = vmatprep.subr.bf16.mxu0 0
    %606 = vmatpush1.bf16.msra.mxu0 0
    %607 = vmatprep.subr.bf16.mxu0 0
    %608 = vmatpush1.bf16.msra.mxu0 %v593
    %609 = vmatprep.subr.bf16.mxu0 0
    %610 = vmatpush1.bf16.msra.mxu0 %v587
    %611 = vmatprep.subr.bf16.mxu0 0
    %612 = vmatpush2.bf16.msra.mxu0 0
    %613 = vmatprep.subr.bf16.mxu0 0
    %614 = vmatpush2.bf16.msra.mxu0 0
    %615 = vmatprep.subr.bf16.mxu0 0
    %616 = vmatpush2.bf16.msra.mxu0 0
    %617 = vmatprep.subr.bf16.mxu0 0
    %618 = vmatpush2.bf16.msra.mxu0 0
    %619 = vmatprep.subr.bf16.mxu0 0
    %620 = vmatpush2.bf16.msra.mxu0 0
    %621 = vmatprep.subr.bf16.mxu0 0
    %622 = vmatpush2.bf16.msra.mxu0 0
    %623 = vmatprep.subr.bf16.mxu0 0
    %624 = vmatpush2.bf16.msra.mxu0 0
    %625 = vmatprep.subr.bf16.mxu0 0
    %626 = vmatpush2.bf16.msra.mxu0 0
    %627 = vmatprep.mubr.bf16.mxu0 0
    %628 = vmatmul.mubr.bf16.gmra.mxu0 %v590
    %v629 = vpop.f32.mrf.mxu0
    %v630 = vadd.f32 0.0, %v629
    %v631 = vpop.f32.mrf.mxu0
    %v632 = vpop.f32.mrf.mxu0
    %v633 = vadd.f32 0.0, %v632
    %v634 = vpop.f32.mrf.mxu0
    %635 = vdwg.mxu0
    %637 = vset.pattern.permute.xlu0 0
    %638 = vperm.xlu0 %637, %v146
    %v639 = vpop.permute.xlu0 %638
    %642 = vset.pattern.permute.xlu0 0
    %643 = vperm.xlu0 %642, %v147
    %v644 = vpop.permute.xlu0 %643
    %v646 = vmul.f32 %v630, %v639
    %v647 = vmul.f32 %v633, %v644
    %v648 = vld [vmem:[%s14] sm:$0xf]
    %v649 = vld [vmem:[%s14 + $0x4] sm:$0xf]
    %v650 = vld [vmem:[%s14 + $0x8] sm:$0xf]
    %v651 = vld [vmem:[%s14 + $0xc] sm:$0xf]
    %v652 = vld [vmem:[%s15] sm:$0xf]
    %v653 = vld [vmem:[%s15 + $0x4] sm:$0xf]
    %v654 = vld [vmem:[%s15 + $0x8] sm:$0xf]
    %v655 = vld [vmem:[%s15 + $0xc] sm:$0xf]
    %v656 = vpack.c.bf16 %v586, %v585
    %v661 = vunpack.c.l.b16 %v652
    %v662 = vunpack.c.l.b16 %v653
    %v663 = vunpack.c.l.b16 %v654
    %v664 = vunpack.c.l.b16 %v655
    %v665 = vpack.c.b16 %v662, %v661
    %v666 = vpack.c.b16 %v664, %v663
    %v670 = vsel %vm167, %v656, 0
    %672 = vmatprep.subr.bf16.mxu0 0
    %673 = vmatpush1.bf16.msra.mxu0 0
    %674 = vmatprep.subr.bf16.mxu0 0
    %675 = vmatpush1.bf16.msra.mxu0 0
    %676 = vmatprep.subr.bf16.mxu0 0
    %677 = vmatpush1.bf16.msra.mxu0 0
    %678 = vmatprep.subr.bf16.mxu0 0
    %679 = vmatpush1.bf16.msra.mxu0 0
    %680 = vmatprep.subr.bf16.mxu0 0
    %681 = vmatpush1.bf16.msra.mxu0 0
    %682 = vmatprep.subr.bf16.mxu0 0
    %683 = vmatpush1.bf16.msra.mxu0 0
    %684 = vmatprep.subr.bf16.mxu0 0
    %685 = vmatpush1.bf16.msra.mxu0 %v666
    %686 = vmatprep.subr.bf16.mxu0 0
    %687 = vmatpush1.bf16.msra.mxu0 %v665
    %688 = vmatprep.subr.bf16.mxu0 0
    %689 = vmatpush2.bf16.msra.mxu0 0
    %690 = vmatprep.subr.bf16.mxu0 0
    %691 = vmatpush2.bf16.msra.mxu0 0
    %692 = vmatprep.subr.bf16.mxu0 0
    %693 = vmatpush2.bf16.msra.mxu0 0
    %694 = vmatprep.subr.bf16.mxu0 0
    %695 = vmatpush2.bf16.msra.mxu0 0
    %696 = vmatprep.subr.bf16.mxu0 0
    %697 = vmatpush2.bf16.msra.mxu0 0
    %698 = vmatprep.subr.bf16.mxu0 0
    %699 = vmatpush2.bf16.msra.mxu0 0
    %700 = vmatprep.subr.bf16.mxu0 0
    %701 = vmatpush2.bf16.msra.mxu0 0
    %702 = vmatprep.subr.bf16.mxu0 0
    %703 = vmatpush2.bf16.msra.mxu0 0
    %704 = vmatprep.mubr.bf16.mxu0 0
    %705 = vmatmul.mubr.bf16.gmra.mxu0 %v670
    %v706 = vpop.f32.mrf.mxu0
    %v707 = vadd.f32 0.0, %v706
    %v708 = vpop.f32.mrf.mxu0
    %v709 = vpop.f32.mrf.mxu0
    %v710 = vadd.f32 0.0, %v709
    %v711 = vpop.f32.mrf.mxu0
    %712 = vdwg.mxu0
    %v717 = vunpack.c.l.b16 %v648
    %v718 = vunpack.c.l.b16 %v649
    %v719 = vunpack.c.l.b16 %v650
    %v720 = vunpack.c.l.b16 %v651
    %v721 = vpack.c.b16 %v718, %v717
    %v722 = vpack.c.b16 %v720, %v719
    %725 = vmatprep.subr.bf16.mxu0 0
    %726 = vmatpush1.bf16.msra.mxu0 0
    %727 = vmatprep.subr.bf16.mxu0 0
    %728 = vmatpush1.bf16.msra.mxu0 0
    %729 = vmatprep.subr.bf16.mxu0 0
    %730 = vmatpush1.bf16.msra.mxu0 0
    %731 = vmatprep.subr.bf16.mxu0 0
    %732 = vmatpush1.bf16.msra.mxu0 0
    %733 = vmatprep.subr.bf16.mxu0 0
    %734 = vmatpush1.bf16.msra.mxu0 0
    %735 = vmatprep.subr.bf16.mxu0 0
    %736 = vmatpush1.bf16.msra.mxu0 0
    %737 = vmatprep.subr.bf16.mxu0 0
    %738 = vmatpush1.bf16.msra.mxu0 %v722
    %739 = vmatprep.subr.bf16.mxu0 0
    %740 = vmatpush1.bf16.msra.mxu0 %v721
    %741 = vmatprep.subr.bf16.mxu0 0
    %742 = vmatpush2.bf16.msra.mxu0 0
    %743 = vmatprep.subr.bf16.mxu0 0
    %744 = vmatpush2.bf16.msra.mxu0 0
    %745 = vmatprep.subr.bf16.mxu0 0
    %746 = vmatpush2.bf16.msra.mxu0 0
    %747 = vmatprep.subr.bf16.mxu0 0
    %748 = vmatpush2.bf16.msra.mxu0 0
    %749 = vmatprep.subr.bf16.mxu0 0
    %750 = vmatpush2.bf16.msra.mxu0 0
    %751 = vmatprep.subr.bf16.mxu0 0
    %752 = vmatpush2.bf16.msra.mxu0 0
    %753 = vmatprep.subr.bf16.mxu0 0
    %754 = vmatpush2.bf16.msra.mxu0 0
    %755 = vmatprep.subr.bf16.mxu0 0
    %756 = vmatpush2.bf16.msra.mxu0 0
    %757 = vmatprep.mubr.bf16.mxu0 0
    %758 = vmatmul.mubr.bf16.gmra.mxu0 %v169
    %v759 = vpop.f32.mrf.mxu0
    %v760 = vadd.f32 %v707, %v759
    %v761 = vpop.f32.mrf.mxu0
    %v762 = vpop.f32.mrf.mxu0
    %v763 = vadd.f32 %v710, %v762
    %v764 = vpop.f32.mrf.mxu0
    %765 = vdwg.mxu0
    %v766 = vld [vmem:[%s16] sm:$0xf]
    %v767 = vld [vmem:[%s16 + $0x4] sm:$0xf]
    %v768 = vld [vmem:[%s16 + $0x8] sm:$0xf]
    %v769 = vld [vmem:[%s16 + $0xc] sm:$0xf]
    %v770 = vpack.c.bf16 %v647, %v646
    %v775 = vunpack.c.l.b16 %v766
    %v776 = vunpack.c.l.b16 %v767
    %v777 = vunpack.c.l.b16 %v768
    %v778 = vunpack.c.l.b16 %v769
    %v779 = vpack.c.b16 %v776, %v775
    %v780 = vpack.c.b16 %v778, %v777
    %v784 = vsel %vm167, %v770, 0
    %786 = vmatprep.subr.bf16.mxu0 0
    %787 = vmatpush1.bf16.msra.mxu0 0
    %788 = vmatprep.subr.bf16.mxu0 0
    %789 = vmatpush1.bf16.msra.mxu0 0
    %790 = vmatprep.subr.bf16.mxu0 0
    %791 = vmatpush1.bf16.msra.mxu0 0
    %792 = vmatprep.subr.bf16.mxu0 0
    %793 = vmatpush1.bf16.msra.mxu0 0
    %794 = vmatprep.subr.bf16.mxu0 0
    %795 = vmatpush1.bf16.msra.mxu0 0
    %796 = vmatprep.subr.bf16.mxu0 0
    %797 = vmatpush1.bf16.msra.mxu0 0
    %798 = vmatprep.subr.bf16.mxu0 0
    %799 = vmatpush1.bf16.msra.mxu0 %v780
    %800 = vmatprep.subr.bf16.mxu0 0
    %801 = vmatpush1.bf16.msra.mxu0 %v779
    %802 = vmatprep.subr.bf16.mxu0 0
    %803 = vmatpush2.bf16.msra.mxu0 0
    %804 = vmatprep.subr.bf16.mxu0 0
    %805 = vmatpush2.bf16.msra.mxu0 0
    %806 = vmatprep.subr.bf16.mxu0 0
    %807 = vmatpush2.bf16.msra.mxu0 0
    %808 = vmatprep.subr.bf16.mxu0 0
    %809 = vmatpush2.bf16.msra.mxu0 0
    %810 = vmatprep.subr.bf16.mxu0 0
    %811 = vmatpush2.bf16.msra.mxu0 0
    %812 = vmatprep.subr.bf16.mxu0 0
    %813 = vmatpush2.bf16.msra.mxu0 0
    %814 = vmatprep.subr.bf16.mxu0 0
    %815 = vmatpush2.bf16.msra.mxu0 0
    %816 = vmatprep.subr.bf16.mxu0 0
    %817 = vmatpush2.bf16.msra.mxu0 0
    %818 = vmatprep.mubr.bf16.mxu0 0
    %819 = vmatmul.mubr.bf16.gmra.mxu0 %v784
    %v820 = vpop.f32.mrf.mxu0
    %v821 = vadd.f32 0.0, %v820
    %v822 = vpop.f32.mrf.mxu0
    %v823 = vpop.f32.mrf.mxu0
    %v824 = vadd.f32 0.0, %v823
    %v825 = vpop.f32.mrf.mxu0
    %826 = vdwg.mxu0
    %v827 = vadd.f32 %v760, %v821
    %v828 = vadd.f32 %v763, %v824
    %v829 = vld [vmem:[%s17] sm:$0x1]
    %v831 = vlaneseq
    %v832 = vshrl.u32 %v831, 7
    %v833 = vsub.s32 0, %v832
    %v834 = vrot.slane %v829, %v833
    %v836 = vadd.f32 %v827, %v834
    %v837 = vadd.f32 %v828, %v834
    %v838 = vmax.f32 %v836, 0.0
    %v839 = vmax.f32 %v837, 0.0
    %v840 = vld [vmem:[%s18] sm:$0xf]
    %v841 = vld [vmem:[%s18 + $0x4] sm:$0xf]
    %v842 = vld [vmem:[%s18 + $0x8] sm:$0xf]
    %v843 = vld [vmem:[%s18 + $0xc] sm:$0xf]
    %v844 = vld [vmem:[%s18 + $0x10] sm:$0xf]
    %v845 = vld [vmem:[%s18 + $0x14] sm:$0xf]
    %v846 = vld [vmem:[%s18 + $0x18] sm:$0xf]
    %v847 = vld [vmem:[%s18 + $0x1c] sm:$0xf]
    %v848 = vpack.c.bf16 %v839, %v838
    %v857 = vunpack.c.l.b16 %v840
    %v858 = vunpack.c.l.b16 %v841
    %v859 = vunpack.c.l.b16 %v842
    %v860 = vunpack.c.l.b16 %v843
    %v861 = vunpack.c.l.b16 %v844
    %v862 = vunpack.c.l.b16 %v845
    %v863 = vunpack.c.l.b16 %v846
    %v864 = vunpack.c.l.b16 %v847
    %v865 = vpack.c.b16 %v858, %v857
    %v866 = vpack.c.b16 %v860, %v859
    %v867 = vpack.c.b16 %v862, %v861
    %v868 = vpack.c.b16 %v864, %v863
    %v874 = vsel %vm376, %v848, 0
    %876 = vmatprep.subr.bf16.mxu0 0
    %877 = vmatpush1.bf16.msra.mxu0 0
    %878 = vmatprep.subr.bf16.mxu0 0
    %879 = vmatpush1.bf16.msra.mxu0 0
    %880 = vmatprep.subr.bf16.mxu0 0
    %881 = vmatpush1.bf16.msra.mxu0 0
    %882 = vmatprep.subr.bf16.mxu0 0
    %883 = vmatpush1.bf16.msra.mxu0 0
    %884 = vmatprep.subr.bf16.mxu0 0
    %885 = vmatpush1.bf16.msra.mxu0 %v868
    %886 = vmatprep.subr.bf16.mxu0 0
    %887 = vmatpush1.bf16.msra.mxu0 %v867
    %888 = vmatprep.subr.bf16.mxu0 0
    %889 = vmatpush1.bf16.msra.mxu0 %v866
    %890 = vmatprep.subr.bf16.mxu0 0
    %891 = vmatpush1.bf16.msra.mxu0 %v865
    %892 = vmatprep.subr.bf16.mxu0 0
    %893 = vmatpush2.bf16.msra.mxu0 0
    %894 = vmatprep.subr.bf16.mxu0 0
    %895 = vmatpush2.bf16.msra.mxu0 0
    %896 = vmatprep.subr.bf16.mxu0 0
    %897 = vmatpush2.bf16.msra.mxu0 0
    %898 = vmatprep.subr.bf16.mxu0 0
    %899 = vmatpush2.bf16.msra.mxu0 0
    %900 = vmatprep.subr.bf16.mxu0 0
    %901 = vmatpush2.bf16.msra.mxu0 0
    %902 = vmatprep.subr.bf16.mxu0 0
    %903 = vmatpush2.bf16.msra.mxu0 0
    %904 = vmatprep.subr.bf16.mxu0 0
    %905 = vmatpush2.bf16.msra.mxu0 0
    %906 = vmatprep.subr.bf16.mxu0 0
    %907 = vmatpush2.bf16.msra.mxu0 0
    %908 = vmatprep.mubr.bf16.mxu0 0
    %909 = vmatmul.mubr.bf16.gmra.mxu0 %v874
    %v910 = vpop.f32.mrf.mxu0
    %v911 = vadd.f32 0.0, %v910
    %v912 = vpop.f32.mrf.mxu0
    %v913 = vpop.f32.mrf.mxu0
    %v914 = vadd.f32 0.0, %v913
    %v915 = vpop.f32.mrf.mxu0
    %916 = vdwg.mxu0
    %v917 = vadd.f32 %v148, %v911
    %v918 = vadd.f32 %v149, %v914
    %v919 = vld [vmem:[%s19] sm:$0x1]
    %v921 = vlaneseq
    %v922 = vshrl.u32 %v921, 7
    %v923 = vsub.s32 0, %v922
    %v924 = vrot.slane %v919, %v923
    %v926 = vadd.f32 %v917, %v924
    %v927 = vadd.f32 %v918, %v924
    %v928 = vpack.c.bf16 %v927, %v926
    %v930 = vsel %vm167, %v928, 0
    %932 = vmatprep.subr.bf16.mxu0 0
    %933 = vmatpush1.bf16.msra.mxu0 0
    %934 = vmatprep.subr.bf16.mxu0 0
    %935 = vmatpush1.bf16.msra.mxu0 0
    %936 = vmatprep.subr.bf16.mxu0 0
    %937 = vmatpush1.bf16.msra.mxu0 0
    %938 = vmatprep.subr.bf16.mxu0 0
    %939 = vmatpush1.bf16.msra.mxu0 0
    %940 = vmatprep.subr.bf16.mxu0 0
    %941 = vmatpush1.bf16.msra.mxu0 0
    %942 = vmatprep.subr.bf16.mxu0 0
    %943 = vmatpush1.bf16.msra.mxu0 0
    %944 = vmatprep.subr.bf16.mxu0 0
    %945 = vmatpush1.bf16.msra.mxu0 %v164
    %946 = vmatprep.subr.bf16.mxu0 0
    %947 = vmatpush1.bf16.msra.mxu0 %v163
    %948 = vmatprep.subr.bf16.mxu0 0
    %949 = vmatpush2.bf16.msra.mxu0 0
    %950 = vmatprep.subr.bf16.mxu0 0
    %951 = vmatpush2.bf16.msra.mxu0 0
    %952 = vmatprep.subr.bf16.mxu0 0
    %953 = vmatpush2.bf16.msra.mxu0 0
    %954 = vmatprep.subr.bf16.mxu0 0
    %955 = vmatpush2.bf16.msra.mxu0 0
    %956 = vmatprep.subr.bf16.mxu0 0
    %957 = vmatpush2.bf16.msra.mxu0 0
    %958 = vmatprep.subr.bf16.mxu0 0
    %959 = vmatpush2.bf16.msra.mxu0 0
    %960 = vmatprep.subr.bf16.mxu0 0
    %961 = vmatpush2.bf16.msra.mxu0 0
    %962 = vmatprep.subr.bf16.mxu0 0
    %963 = vmatpush2.bf16.msra.mxu0 0
    %964 = vmatprep.mubr.bf16.mxu0 0
    %965 = vmatmul.mubr.bf16.gmra.mxu0 %v930
    %v966 = vpop.f32.mrf.mxu0
    %v967 = vadd.f32 0.0, %v966
    %v968 = vpop.f32.mrf.mxu0
    %v969 = vpop.f32.mrf.mxu0
    %v970 = vadd.f32 0.0, %v969
    %v971 = vpop.f32.mrf.mxu0
    %972 = vdwg.mxu0
    %973 = vmatprep.subr.bf16.mxu0 0
    %974 = vmatpush1.bf16.msra.mxu0 0
    %975 = vmatprep.subr.bf16.mxu0 0
    %976 = vmatpush1.bf16.msra.mxu0 0
    %977 = vmatprep.subr.bf16.mxu0 0
    %978 = vmatpush1.bf16.msra.mxu0 0
    %979 = vmatprep.subr.bf16.mxu0 0
    %980 = vmatpush1.bf16.msra.mxu0 0
    %981 = vmatprep.subr.bf16.mxu0 0
    %982 = vmatpush1.bf16.msra.mxu0 0
    %983 = vmatprep.subr.bf16.mxu0 0
    %984 = vmatpush1.bf16.msra.mxu0 0
    %985 = vmatprep.subr.bf16.mxu0 0
    %986 = vmatpush1.bf16.msra.mxu0 %v225
    %987 = vmatprep.subr.bf16.mxu0 0
    %988 = vmatpush1.bf16.msra.mxu0 %v224
    %989 = vmatprep.subr.bf16.mxu0 0
    %990 = vmatpush2.bf16.msra.mxu0 0
    %991 = vmatprep.subr.bf16.mxu0 0
    %992 = vmatpush2.bf16.msra.mxu0 0
    %993 = vmatprep.subr.bf16.mxu0 0
    %994 = vmatpush2.bf16.msra.mxu0 0
    %995 = vmatprep.subr.bf16.mxu0 0
    %996 = vmatpush2.bf16.msra.mxu0 0
    %997 = vmatprep.subr.bf16.mxu0 0
    %998 = vmatpush2.bf16.msra.mxu0 0
    %999 = vmatprep.subr.bf16.mxu0 0
    %1000 = vmatpush2.bf16.msra.mxu0 0
    %1001 = vmatprep.subr.bf16.mxu0 0
    %1002 = vmatpush2.bf16.msra.mxu0 0
    %1003 = vmatprep.subr.bf16.mxu0 0
    %1004 = vmatpush2.bf16.msra.mxu0 0
    %1005 = vmatprep.mubr.bf16.mxu0 0
    %1006 = vmatmul.mubr.bf16.gmra.mxu0 %v930
    %v1007 = vpop.f32.mrf.mxu0
    %v1008 = vadd.f32 0.0, %v1007
    %v1009 = vpop.f32.mrf.mxu0
    %v1010 = vpop.f32.mrf.mxu0
    %v1011 = vadd.f32 0.0, %v1010
    %v1012 = vpop.f32.mrf.mxu0
    %1013 = vdwg.mxu0
    %v1014 = vpack.c.bf16 %v970, %v967
    %v1015 = vpack.c.bf16 %v1011, %v1008
    %1016 = vmatprep.subr.bf16.mxu0 0
    %1017 = vmatpush1.bf16.msra.mxu0 0
    %1018 = vmatprep.subr.bf16.mxu0 0
    %1019 = vmatpush1.bf16.msra.mxu0 0
    %1020 = vmatprep.subr.bf16.mxu0 0
    %1021 = vmatpush1.bf16.msra.mxu0 0
    %1022 = vmatprep.subr.bf16.mxu0 0
    %1023 = vmatpush1.bf16.msra.mxu0 0
    %1024 = vmatprep.subr.bf16.mxu0 0
    %1025 = vmatpush1.bf16.msra.mxu0 0
    %1026 = vmatprep.subr.bf16.mxu0 0
    %1027 = vmatpush1.bf16.msra.mxu0 0
    %1028 = vmatprep.subr.bf16.mxu0 0
    %1029 = vmatpush1.bf16.msra.mxu0 %v1015
    %1030 = vmatprep.subr.bf16.mxu0 0
    %1031 = vmatpush1.bf16.msra.mxu0 %v1014
    %1032 = vmatprep.subr.bf16.mxu0 0
    %1033 = vmatpush2.bf16.msra.mxu0 0
    %1034 = vmatprep.subr.bf16.mxu0 0
    %1035 = vmatpush2.bf16.msra.mxu0 0
    %1036 = vmatprep.subr.bf16.mxu0 0
    %1037 = vmatpush2.bf16.msra.mxu0 0
    %1038 = vmatprep.subr.bf16.mxu0 0
    %1039 = vmatpush2.bf16.msra.mxu0 0
    %1040 = vmatprep.subr.bf16.mxu0 0
    %1041 = vmatpush2.bf16.msra.mxu0 0
    %1042 = vmatprep.subr.bf16.mxu0 0
    %1043 = vmatpush2.bf16.msra.mxu0 0
    %1044 = vmatprep.subr.bf16.mxu0 0
    %1045 = vmatpush2.bf16.msra.mxu0 0
    %1046 = vmatprep.subr.bf16.mxu0 0
    %1047 = vmatpush2.bf16.msra.mxu0 0
    %1048 = vmatprep.mubr.bf16.mxu0 0
    %1049 = vmatmul.mubr.bf16.gmra.mxu0 %v279
    %v1050 = vpop.f32.mrf.mxu0
    %v1051 = vadd.f32 %v276, %v1050
    %v1052 = vpop.f32.mrf.mxu0
    %v1053 = vpop.f32.mrf.mxu0
    %v1054 = vadd.f32 %v276, %v1053
    %v1055 = vpop.f32.mrf.mxu0
    %1056 = vmatprep.mubr.bf16.mxu0 0
    %1057 = vmatmul.mubr.bf16.gmra.mxu0 %v282
    %v1058 = vpop.f32.mrf.mxu0
    %v1059 = vadd.f32 %v276, %v1058
    %v1060 = vpop.f32.mrf.mxu0
    %v1061 = vpop.f32.mrf.mxu0
    %v1062 = vpop.f32.mrf.mxu0
    %1063 = vdwg.mxu0
    %v1064 = vmax.f32 %v1051, 0.0
    %v1065 = vmax.f32 %v1054, 0.0
    %v1066 = vmax.f32 %v1059, 0.0
    %v1067 = vpack.c.bf16 %v1065, %v1064
    %v1068 = vpack.c.bf16 %v1066, %v1066
    %v1070 = vsel %vm376, %v1067, 0
    %v1073 = vsel %vm376, %v1068, 0
    %1075 = vmatprep.subr.bf16.mxu0 0
    %1076 = vmatpush1.bf16.msra.mxu0 0
    %1077 = vmatprep.subr.bf16.mxu0 0
    %1078 = vmatpush1.bf16.msra.mxu0 0
    %1079 = vmatprep.subr.bf16.mxu0 0
    %1080 = vmatpush1.bf16.msra.mxu0 0
    %1081 = vmatprep.subr.bf16.mxu0 0
    %1082 = vmatpush1.bf16.msra.mxu0 0
    %1083 = vmatprep.subr.bf16.mxu0 0
    %1084 = vmatpush1.bf16.msra.mxu0 %v371
    %1085 = vmatprep.subr.bf16.mxu0 0
    %1086 = vmatpush1.bf16.msra.mxu0 %v370
    %1087 = vmatprep.subr.bf16.mxu0 0
    %1088 = vmatpush1.bf16.msra.mxu0 %v369
    %1089 = vmatprep.subr.bf16.mxu0 0
    %1090 = vmatpush1.bf16.msra.mxu0 %v368
    %1091 = vmatprep.subr.bf16.mxu0 0
    %1092 = vmatpush2.bf16.msra.mxu0 0
    %1093 = vmatprep.subr.bf16.mxu0 0
    %1094 = vmatpush2.bf16.msra.mxu0 0
    %1095 = vmatprep.subr.bf16.mxu0 0
    %1096 = vmatpush2.bf16.msra.mxu0 0
    %1097 = vmatprep.subr.bf16.mxu0 0
    %1098 = vmatpush2.bf16.msra.mxu0 0
    %1099 = vmatprep.subr.bf16.mxu0 0
    %1100 = vmatpush2.bf16.msra.mxu0 0
    %1101 = vmatprep.subr.bf16.mxu0 0
    %1102 = vmatpush2.bf16.msra.mxu0 0
    %1103 = vmatprep.subr.bf16.mxu0 0
    %1104 = vmatpush2.bf16.msra.mxu0 0
    %1105 = vmatprep.subr.bf16.mxu0 0
    %1106 = vmatpush2.bf16.msra.mxu0 0
    %1107 = vmatprep.mubr.bf16.mxu0 0
    %1108 = vmatmul.mubr.bf16.gmra.mxu0 %v1070
    %v1109 = vpop.f32.mrf.mxu0
    %v1110 = vadd.f32 %v350, %v1109
    %v1111 = vpop.f32.mrf.mxu0
    %v1112 = vpop.f32.mrf.mxu0
    %v1113 = vadd.f32 %v350, %v1112
    %v1114 = vpop.f32.mrf.mxu0
    %1115 = vmatprep.mubr.bf16.mxu0 0
    %1116 = vmatmul.mubr.bf16.gmra.mxu0 %v1073
    %v1117 = vpop.f32.mrf.mxu0
    %v1118 = vadd.f32 %v350, %v1117
    %v1119 = vpop.f32.mrf.mxu0
    %v1120 = vpop.f32.mrf.mxu0
    %v1121 = vpop.f32.mrf.mxu0
    %1122 = vdwg.mxu0
    %v1123 = vmax.f32 %v1110, 0.0
    %v1124 = vmax.f32 %v1113, 0.0
    %v1125 = vmax.f32 %v1118, 0.0
    %1126 = vmatprep.subr.bf16.mxu0 0
    %1127 = vmatpush1.bf16.msra.mxu0 0
    %1128 = vmatprep.subr.bf16.mxu0 0
    %1129 = vmatpush1.bf16.msra.mxu0 0
    %1130 = vmatprep.subr.bf16.mxu0 0
    %1131 = vmatpush1.bf16.msra.mxu0 0
    %1132 = vmatprep.subr.bf16.mxu0 0
    %1133 = vmatpush1.bf16.msra.mxu0 0
    %1134 = vmatprep.subr.bf16.mxu0 0
    %1135 = vmatpush1.bf16.msra.mxu0 %v468
    %1136 = vmatprep.subr.bf16.mxu0 0
    %1137 = vmatpush1.bf16.msra.mxu0 %v467
    %1138 = vmatprep.subr.bf16.mxu0 0
    %1139 = vmatpush1.bf16.msra.mxu0 %v466
    %1140 = vmatprep.subr.bf16.mxu0 0
    %1141 = vmatpush1.bf16.msra.mxu0 %v465
    %1142 = vmatprep.subr.bf16.mxu0 0
    %1143 = vmatpush2.bf16.msra.mxu0 0
    %1144 = vmatprep.subr.bf16.mxu0 0
    %1145 = vmatpush2.bf16.msra.mxu0 0
    %1146 = vmatprep.subr.bf16.mxu0 0
    %1147 = vmatpush2.bf16.msra.mxu0 0
    %1148 = vmatprep.subr.bf16.mxu0 0
    %1149 = vmatpush2.bf16.msra.mxu0 0
    %1150 = vmatprep.subr.bf16.mxu0 0
    %1151 = vmatpush2.bf16.msra.mxu0 0
    %1152 = vmatprep.subr.bf16.mxu0 0
    %1153 = vmatpush2.bf16.msra.mxu0 0
    %1154 = vmatprep.subr.bf16.mxu0 0
    %1155 = vmatpush2.bf16.msra.mxu0 0
    %1156 = vmatprep.subr.bf16.mxu0 0
    %1157 = vmatpush2.bf16.msra.mxu0 0
    %1158 = vmatprep.mubr.bf16.mxu0 0
    %1159 = vmatmul.mubr.bf16.gmra.mxu0 %v1070
    %v1160 = vpop.f32.mrf.mxu0
    %v1161 = vadd.f32 %v447, %v1160
    %v1162 = vpop.f32.mrf.mxu0
    %v1163 = vpop.f32.mrf.mxu0
    %v1164 = vadd.f32 %v447, %v1163
    %v1165 = vpop.f32.mrf.mxu0
    %1166 = vmatprep.mubr.bf16.mxu0 0
    %1167 = vmatmul.mubr.bf16.gmra.mxu0 %v1073
    %v1168 = vpop.f32.mrf.mxu0
    %v1169 = vadd.f32 %v447, %v1168
    %v1170 = vpop.f32.mrf.mxu0
    %v1171 = vpop.f32.mrf.mxu0
    %v1172 = vpop.f32.mrf.mxu0
    %1173 = vdwg.mxu0
    %v1174 = vmax.f32 %v1161, 0.0
    %v1175 = vmax.f32 %v1164, 0.0
    %v1176 = vmax.f32 %v1169, 0.0
    %v1177 = vpack.c.bf16 %v1124, %v1123
    %v1178 = vpack.c.bf16 %v1125, %v1125
    %v1180 = vsel %vm530, %v1178, 0
    %1182 = vmatprep.subr.bf16.mxu0 0
    %1183 = vmatpush1.bf16.msra.mxu0 0
    %1184 = vmatprep.subr.bf16.mxu0 0
    %1185 = vmatpush1.bf16.msra.mxu0 0
    %1186 = vmatprep.subr.bf16.mxu0 0
    %1187 = vmatpush1.bf16.msra.mxu0 0
    %1188 = vmatprep.subr.bf16.mxu0 0
    %1189 = vmatpush1.bf16.msra.mxu0 0
    %1190 = vmatprep.subr.bf16.mxu0 0
    %1191 = vmatpush1.bf16.msra.mxu0 0
    %1192 = vmatprep.subr.bf16.mxu0 0
    %1193 = vmatpush1.bf16.msra.mxu0 0
    %1194 = vmatprep.subr.bf16.mxu0 0
    %1195 = vmatpush1.bf16.msra.mxu0 %v1180
    %1196 = vmatprep.subr.bf16.mxu0 0
    %1197 = vmatpush1.bf16.msra.mxu0 %v1177
    %1198 = vmatprep.subr.bf16.mxu0 0
    %1199 = vmatpush2.bf16.msra.mxu0 0
    %1200 = vmatprep.subr.bf16.mxu0 0
    %1201 = vmatpush2.bf16.msra.mxu0 0
    %1202 = vmatprep.subr.bf16.mxu0 0
    %1203 = vmatpush2.bf16.msra.mxu0 0
    %1204 = vmatprep.subr.bf16.mxu0 0
    %1205 = vmatpush2.bf16.msra.mxu0 0
    %1206 = vmatprep.subr.bf16.mxu0 0
    %1207 = vmatpush2.bf16.msra.mxu0 0
    %1208 = vmatprep.subr.bf16.mxu0 0
    %1209 = vmatpush2.bf16.msra.mxu0 0
    %1210 = vmatprep.subr.bf16.mxu0 0
    %1211 = vmatpush2.bf16.msra.mxu0 0
    %1212 = vmatprep.subr.bf16.mxu0 0
    %1213 = vmatpush2.bf16.msra.mxu0 0
    %1214 = vmatprep.mubr.bf16.mxu0 0
    %1215 = vmatmul.mubr.bf16.gmra.mxu0 %v528
    %v1216 = vpop.f32.mrf.mxu0
    %v1217 = vadd.f32 0.0, %v1216
    %v1218 = vpop.f32.mrf.mxu0
    %v1219 = vpop.f32.mrf.mxu0
    %v1220 = vadd.f32 0.0, %v1219
    %v1221 = vpop.f32.mrf.mxu0
    %1222 = vdwg.mxu0
    %v1223 = vmul.f32 %v1217, %v578
    %v1224 = vmul.f32 %v1220, %v583
    %v1225 = vpack.c.bf16 %v1175, %v1174
    %v1226 = vpack.c.bf16 %v1176, %v1176
    %v1228 = vsel %vm530, %v1226, 0
    %1230 = vmatprep.subr.bf16.mxu0 0
    %1231 = vmatpush1.bf16.msra.mxu0 0
    %1232 = vmatprep.subr.bf16.mxu0 0
    %1233 = vmatpush1.bf16.msra.mxu0 0
    %1234 = vmatprep.subr.bf16.mxu0 0
    %1235 = vmatpush1.bf16.msra.mxu0 0
    %1236 = vmatprep.subr.bf16.mxu0 0
    %1237 = vmatpush1.bf16.msra.mxu0 0
    %1238 = vmatprep.subr.bf16.mxu0 0
    %1239 = vmatpush1.bf16.msra.mxu0 0
    %1240 = vmatprep.subr.bf16.mxu0 0
    %1241 = vmatpush1.bf16.msra.mxu0 0
    %1242 = vmatprep.subr.bf16.mxu0 0
    %1243 = vmatpush1.bf16.msra.mxu0 %v1228
    %1244 = vmatprep.subr.bf16.mxu0 0
    %1245 = vmatpush1.bf16.msra.mxu0 %v1225
    %1246 = vmatprep.subr.bf16.mxu0 0
    %1247 = vmatpush2.bf16.msra.mxu0 0
    %1248 = vmatprep.subr.bf16.mxu0 0
    %1249 = vmatpush2.bf16.msra.mxu0 0
    %1250 = vmatprep.subr.bf16.mxu0 0
    %1251 = vmatpush2.bf16.msra.mxu0 0
    %1252 = vmatprep.subr.bf16.mxu0 0
    %1253 = vmatpush2.bf16.msra.mxu0 0
    %1254 = vmatprep.subr.bf16.mxu0 0
    %1255 = vmatpush2.bf16.msra.mxu0 0
    %1256 = vmatprep.subr.bf16.mxu0 0
    %1257 = vmatpush2.bf16.msra.mxu0 0
    %1258 = vmatprep.subr.bf16.mxu0 0
    %1259 = vmatpush2.bf16.msra.mxu0 0
    %1260 = vmatprep.subr.bf16.mxu0 0
    %1261 = vmatpush2.bf16.msra.mxu0 0
    %1262 = vmatprep.mubr.bf16.mxu0 0
    %1263 = vmatmul.mubr.bf16.gmra.mxu0 %v590
    %v1264 = vpop.f32.mrf.mxu0
    %v1265 = vadd.f32 0.0, %v1264
    %v1266 = vpop.f32.mrf.mxu0
    %v1267 = vpop.f32.mrf.mxu0
    %v1268 = vadd.f32 0.0, %v1267
    %v1269 = vpop.f32.mrf.mxu0
    %1270 = vdwg.mxu0
    %v1271 = vmul.f32 %v1265, %v639
    %v1272 = vmul.f32 %v1268, %v644
    %v1273 = vpack.c.bf16 %v1224, %v1223
    %v1275 = vsel %vm167, %v1273, 0
    %1277 = vmatprep.subr.bf16.mxu0 0
    %1278 = vmatpush1.bf16.msra.mxu0 0
    %1279 = vmatprep.subr.bf16.mxu0 0
    %1280 = vmatpush1.bf16.msra.mxu0 0
    %1281 = vmatprep.subr.bf16.mxu0 0
    %1282 = vmatpush1.bf16.msra.mxu0 0
    %1283 = vmatprep.subr.bf16.mxu0 0
    %1284 = vmatpush1.bf16.msra.mxu0 0
    %1285 = vmatprep.subr.bf16.mxu0 0
    %1286 = vmatpush1.bf16.msra.mxu0 0
    %1287 = vmatprep.subr.bf16.mxu0 0
    %1288 = vmatpush1.bf16.msra.mxu0 0
    %1289 = vmatprep.subr.bf16.mxu0 0
    %1290 = vmatpush1.bf16.msra.mxu0 %v666
    %1291 = vmatprep.subr.bf16.mxu0 0
    %1292 = vmatpush1.bf16.msra.mxu0 %v665
    %1293 = vmatprep.subr.bf16.mxu0 0
    %1294 = vmatpush2.bf16.msra.mxu0 0
    %1295 = vmatprep.subr.bf16.mxu0 0
    %1296 = vmatpush2.bf16.msra.mxu0 0
    %1297 = vmatprep.subr.bf16.mxu0 0
    %1298 = vmatpush2.bf16.msra.mxu0 0
    %1299 = vmatprep.subr.bf16.mxu0 0
    %1300 = vmatpush2.bf16.msra.mxu0 0
    %1301 = vmatprep.subr.bf16.mxu0 0
    %1302 = vmatpush2.bf16.msra.mxu0 0
    %1303 = vmatprep.subr.bf16.mxu0 0
    %1304 = vmatpush2.bf16.msra.mxu0 0
    %1305 = vmatprep.subr.bf16.mxu0 0
    %1306 = vmatpush2.bf16.msra.mxu0 0
    %1307 = vmatprep.subr.bf16.mxu0 0
    %1308 = vmatpush2.bf16.msra.mxu0 0
    %1309 = vmatprep.mubr.bf16.mxu0 0
    %1310 = vmatmul.mubr.bf16.gmra.mxu0 %v1275
    %v1311 = vpop.f32.mrf.mxu0
    %v1312 = vadd.f32 0.0, %v1311
    %v1313 = vpop.f32.mrf.mxu0
    %v1314 = vpop.f32.mrf.mxu0
    %v1315 = vadd.f32 0.0, %v1314
    %v1316 = vpop.f32.mrf.mxu0
    %1317 = vdwg.mxu0
    %1318 = vmatprep.subr.bf16.mxu0 0
    %1319 = vmatpush1.bf16.msra.mxu0 0
    %1320 = vmatprep.subr.bf16.mxu0 0
    %1321 = vmatpush1.bf16.msra.mxu0 0
    %1322 = vmatprep.subr.bf16.mxu0 0
    %1323 = vmatpush1.bf16.msra.mxu0 0
    %1324 = vmatprep.subr.bf16.mxu0 0
    %1325 = vmatpush1.bf16.msra.mxu0 0
    %1326 = vmatprep.subr.bf16.mxu0 0
    %1327 = vmatpush1.bf16.msra.mxu0 0
    %1328 = vmatprep.subr.bf16.mxu0 0
    %1329 = vmatpush1.bf16.msra.mxu0 0
    %1330 = vmatprep.subr.bf16.mxu0 0
    %1331 = vmatpush1.bf16.msra.mxu0 %v722
    %1332 = vmatprep.subr.bf16.mxu0 0
    %1333 = vmatpush1.bf16.msra.mxu0 %v721
    %1334 = vmatprep.subr.bf16.mxu0 0
    %1335 = vmatpush2.bf16.msra.mxu0 0
    %1336 = vmatprep.subr.bf16.mxu0 0
    %1337 = vmatpush2.bf16.msra.mxu0 0
    %1338 = vmatprep.subr.bf16.mxu0 0
    %1339 = vmatpush2.bf16.msra.mxu0 0
    %1340 = vmatprep.subr.bf16.mxu0 0
    %1341 = vmatpush2.bf16.msra.mxu0 0
    %1342 = vmatprep.subr.bf16.mxu0 0
    %1343 = vmatpush2.bf16.msra.mxu0 0
    %1344 = vmatprep.subr.bf16.mxu0 0
    %1345 = vmatpush2.bf16.msra.mxu0 0
    %1346 = vmatprep.subr.bf16.mxu0 0
    %1347 = vmatpush2.bf16.msra.mxu0 0
    %1348 = vmatprep.subr.bf16.mxu0 0
    %1349 = vmatpush2.bf16.msra.mxu0 0
    %1350 = vmatprep.mubr.bf16.mxu0 0
    %1351 = vmatmul.mubr.bf16.gmra.mxu0 %v930
    %v1352 = vpop.f32.mrf.mxu0
    %v1353 = vadd.f32 %v1312, %v1352
    %v1354 = vpop.f32.mrf.mxu0
    %v1355 = vpop.f32.mrf.mxu0
    %v1356 = vadd.f32 %v1315, %v1355
    %v1357 = vpop.f32.mrf.mxu0
    %1358 = vdwg.mxu0
    %v1359 = vpack.c.bf16 %v1272, %v1271
    %v1361 = vsel %vm167, %v1359, 0
    %1363 = vmatprep.subr.bf16.mxu0 0
    %1364 = vmatpush1.bf16.msra.mxu0 0
    %1365 = vmatprep.subr.bf16.mxu0 0
    %1366 = vmatpush1.bf16.msra.mxu0 0
    %1367 = vmatprep.subr.bf16.mxu0 0
    %1368 = vmatpush1.bf16.msra.mxu0 0
    %1369 = vmatprep.subr.bf16.mxu0 0
    %1370 = vmatpush1.bf16.msra.mxu0 0
    %1371 = vmatprep.subr.bf16.mxu0 0
    %1372 = vmatpush1.bf16.msra.mxu0 0
    %1373 = vmatprep.subr.bf16.mxu0 0
    %1374 = vmatpush1.bf16.msra.mxu0 0
    %1375 = vmatprep.subr.bf16.mxu0 0
    %1376 = vmatpush1.bf16.msra.mxu0 %v780
    %1377 = vmatprep.subr.bf16.mxu0 0
    %1378 = vmatpush1.bf16.msra.mxu0 %v779
    %1379 = vmatprep.subr.bf16.mxu0 0
    %1380 = vmatpush2.bf16.msra.mxu0 0
    %1381 = vmatprep.subr.bf16.mxu0 0
    %1382 = vmatpush2.bf16.msra.mxu0 0
    %1383 = vmatprep.subr.bf16.mxu0 0
    %1384 = vmatpush2.bf16.msra.mxu0 0
    %1385 = vmatprep.subr.bf16.mxu0 0
    %1386 = vmatpush2.bf16.msra.mxu0 0
    %1387 = vmatprep.subr.bf16.mxu0 0
    %1388 = vmatpush2.bf16.msra.mxu0 0
    %1389 = vmatprep.subr.bf16.mxu0 0
    %1390 = vmatpush2.bf16.msra.mxu0 0
    %1391 = vmatprep.subr.bf16.mxu0 0
    %1392 = vmatpush2.bf16.msra.mxu0 0
    %1393 = vmatprep.subr.bf16.mxu0 0
    %1394 = vmatpush2.bf16.msra.mxu0 0
    %1395 = vmatprep.mubr.bf16.mxu0 0
    %1396 = vmatmul.mubr.bf16.gmra.mxu0 %v1361
    %v1397 = vpop.f32.mrf.mxu0
    %v1398 = vadd.f32 0.0, %v1397
    %v1399 = vpop.f32.mrf.mxu0
    %v1400 = vpop.f32.mrf.mxu0
    %v1401 = vadd.f32 0.0, %v1400
    %v1402 = vpop.f32.mrf.mxu0
    %1403 = vdwg.mxu0
    %v1404 = vadd.f32 %v1353, %v1398
    %v1405 = vadd.f32 %v1356, %v1401
    %v1406 = vadd.f32 %v1404, %v834
    %v1407 = vadd.f32 %v1405, %v834
    %v1408 = vmax.f32 %v1406, 0.0
    %v1409 = vmax.f32 %v1407, 0.0
    %v1410 = vpack.c.bf16 %v1409, %v1408
    %v1412 = vsel %vm376, %v1410, 0
    %1414 = vmatprep.subr.bf16.mxu0 0
    %1415 = vmatpush1.bf16.msra.mxu0 0
    %1416 = vmatprep.subr.bf16.mxu0 0
    %1417 = vmatpush1.bf16.msra.mxu0 0
    %1418 = vmatprep.subr.bf16.mxu0 0
    %1419 = vmatpush1.bf16.msra.mxu0 0
    %1420 = vmatprep.subr.bf16.mxu0 0
    %1421 = vmatpush1.bf16.msra.mxu0 0
    %1422 = vmatprep.subr.bf16.mxu0 0
    %1423 = vmatpush1.bf16.msra.mxu0 %v868
    %1424 = vmatprep.subr.bf16.mxu0 0
    %1425 = vmatpush1.bf16.msra.mxu0 %v867
    %1426 = vmatprep.subr.bf16.mxu0 0
    %1427 = vmatpush1.bf16.msra.mxu0 %v866
    %1428 = vmatprep.subr.bf16.mxu0 0
    %1429 = vmatpush1.bf16.msra.mxu0 %v865
    %1430 = vmatprep.subr.bf16.mxu0 0
    %1431 = vmatpush2.bf16.msra.mxu0 0
    %1432 = vmatprep.subr.bf16.mxu0 0
    %1433 = vmatpush2.bf16.msra.mxu0 0
    %1434 = vmatprep.subr.bf16.mxu0 0
    %1435 = vmatpush2.bf16.msra.mxu0 0
    %1436 = vmatprep.subr.bf16.mxu0 0
    %1437 = vmatpush2.bf16.msra.mxu0 0
    %1438 = vmatprep.subr.bf16.mxu0 0
    %1439 = vmatpush2.bf16.msra.mxu0 0
    %1440 = vmatprep.subr.bf16.mxu0 0
    %1441 = vmatpush2.bf16.msra.mxu0 0
    %1442 = vmatprep.subr.bf16.mxu0 0
    %1443 = vmatpush2.bf16.msra.mxu0 0
    %1444 = vmatprep.subr.bf16.mxu0 0
    %1445 = vmatpush2.bf16.msra.mxu0 0
    %1446 = vmatprep.mubr.bf16.mxu0 0
    %1447 = vmatmul.mubr.bf16.gmra.mxu0 %v1412
    %v1448 = vpop.f32.mrf.mxu0
    %v1449 = vadd.f32 0.0, %v1448
    %v1450 = vpop.f32.mrf.mxu0
    %v1451 = vpop.f32.mrf.mxu0
    %v1452 = vadd.f32 0.0, %v1451
    %v1453 = vpop.f32.mrf.mxu0
    %1454 = vdwg.mxu0
    %v1455 = vadd.f32 %v926, %v1449
    %v1456 = vadd.f32 %v927, %v1452
    %v1457 = vadd.f32 %v1455, %v924
    %v1458 = vadd.f32 %v1456, %v924
    %v1459 = vld [vmem:[%s20] sm:$0xf]
    %v1460 = vld [vmem:[%s20 + $0x4] sm:$0xf]
    %v1461 = vld [vmem:[%s20 + $0x8] sm:$0xf]
    %v1462 = vld [vmem:[%s20 + $0xc] sm:$0xf]
    %v1463 = vpack.c.bf16 %v1458, %v1457
    %v1464 = vld [vmem:[%s21] sm:$0x1]
    %v1466 = vlaneseq
    %v1467 = vshrl.u32 %v1466, 7
    %v1468 = vsub.s32 0, %v1467
    %v1469 = vrot.slane %v1464, %v1468
    %v1475 = vunpack.c.l.b16 %v1459
    %v1476 = vunpack.c.l.b16 %v1460
    %v1477 = vunpack.c.l.b16 %v1461
    %v1478 = vunpack.c.l.b16 %v1462
    %v1479 = vpack.c.b16 %v1476, %v1475
    %v1480 = vpack.c.b16 %v1478, %v1477
    %v1484 = vsel %vm167, %v1463, 0
    %1486 = vmatprep.subr.bf16.mxu0 0
    %1487 = vmatpush1.bf16.msra.mxu0 0
    %1488 = vmatprep.subr.bf16.mxu0 0
    %1489 = vmatpush1.bf16.msra.mxu0 0
    %1490 = vmatprep.subr.bf16.mxu0 0
    %1491 = vmatpush1.bf16.msra.mxu0 0
    %1492 = vmatprep.subr.bf16.mxu0 0
    %1493 = vmatpush1.bf16.msra.mxu0 0
    %1494 = vmatprep.subr.bf16.mxu0 0
    %1495 = vmatpush1.bf16.msra.mxu0 0
    %1496 = vmatprep.subr.bf16.mxu0 0
    %1497 = vmatpush1.bf16.msra.mxu0 0
    %1498 = vmatprep.subr.bf16.mxu0 0
    %1499 = vmatpush1.bf16.msra.mxu0 %v1480
    %1500 = vmatprep.subr.bf16.mxu0 0
    %1501 = vmatpush1.bf16.msra.mxu0 %v1479
    %1502 = vmatprep.subr.bf16.mxu0 0
    %1503 = vmatpush2.bf16.msra.mxu0 0
    %1504 = vmatprep.subr.bf16.mxu0 0
    %1505 = vmatpush2.bf16.msra.mxu0 0
    %1506 = vmatprep.subr.bf16.mxu0 0
    %1507 = vmatpush2.bf16.msra.mxu0 0
    %1508 = vmatprep.subr.bf16.mxu0 0
    %1509 = vmatpush2.bf16.msra.mxu0 0
    %1510 = vmatprep.subr.bf16.mxu0 0
    %1511 = vmatpush2.bf16.msra.mxu0 0
    %1512 = vmatprep.subr.bf16.mxu0 0
    %1513 = vmatpush2.bf16.msra.mxu0 0
    %1514 = vmatprep.subr.bf16.mxu0 0
    %1515 = vmatpush2.bf16.msra.mxu0 0
    %1516 = vmatprep.subr.bf16.mxu0 0
    %1517 = vmatpush2.bf16.msra.mxu0 0
    %1518 = vmatprep.mubr.bf16.mxu0 0
    %1519 = vmatmul.mubr.bf16.gmra.mxu0 %v1484
    %v1520 = vpop.f32.mrf.mxu0
    %v1521 = vadd.f32 %v1469, %v1520
    %v1522 = vpop.f32.mrf.mxu0
    %v1523 = vpop.f32.mrf.mxu0
    %v1524 = vadd.f32 %v1469, %v1523
    %v1525 = vpop.f32.mrf.mxu0
    %1526 = vdwg.mxu0
    %1527 = vst.msk [vmem:[#allocation2] sm:$0xff] %vm376, %v1521
    %1528 = vst.msk [vmem:[#allocation2 + $0x8] sm:$0xff] %vm376, %v1524
    // Predicated region
    $region90: #{gnn_forward.1} parent=1 // pred_check
      _
    $region91: #{gnn_forward.1} parent=1 // pred_check_branch
      %1530 = sbr.rel (0) target = $region93
    $region92: #{gnn_forward.1} parent=1 // pred_region
      %s1532 = ssub.s32 256, 256
      %1533 = vsyncadd [#allocation3], %s1532
      %s1534 = sshll.u32 [#allocation2], 4
      %s1535 = int_to_ptr.vmem [resolvable:$true] %s1534
      %1540 = dma.vmem_to_hbm [thread:$0]  %s1535, 256, %s22, [#allocation3], 128, 128, 8
    $region93: #{gnn_forward.1} parent=1 // pred_fallthru
      _
    // Predicated region
    $region94: #{gnn_forward.1} parent=1 // pred_check
      _
    $region95: #{gnn_forward.1} parent=1 // pred_check_branch
      %1542 = sbr.rel (0) target = $region97
    $region96: #{gnn_forward.1} parent=1 // pred_region
      %1543 = dma.done [#allocation3], 256
    $region97: #{gnn_forward.1} parent=1 // pred_fallthru
      _
    %1544 = vsyncpa [#allocation3], 1

</llo_original>
